<compile_context>
chip_gen: v5e
topology: v5e:2x2
jax: 0.10.0
libtpu: 0.0.40
codegen_flags: <defaults>
</compile_context>

<pallas_src>
import numpy as np
import jax
import jax.numpy as jnp
from jax.experimental import pallas as pl
from jax.experimental.pallas import tpu as pltpu

# ----- model config (small, consistent with the module's forward) -----
INPUT_SIZE = 4
D_MODEL = 32
NHEAD = 4
NUM_LAYERS = 2
OUTPUT_SIZE = 4      # == HORIZON so that .view(-1, horizon, 1) keeps batch dim
HORIZON = 4
BATCH = 2
SEQ = 8
FF = 4 * D_MODEL     # dim_feedforward = 4 * d_model
EPS = 1e-5           # nn.LayerNorm default eps
DH = D_MODEL // NHEAD
SCALE = 1.0 / float(np.sqrt(DH))

# ----- packed weight-slab layout (rows x 128 lanes, all starts 8-aligned) ---
LANES = 128
HDR_R = 0            # 8-row header: rows 0..3 emb_w, row 4 dec_b, rows 5..6 sel
HDR_DECB = 4
HDR_SEL = 5
DECW_R = 8           # (D_MODEL, OUTPUT_SIZE)           rows  8..39
PE_R = 40            # (BATCH*SEQ, D_MODEL) PE + emb_b  rows 40..55
LAYER_R = 56         # per-layer blocks start here
OFF_WQKV = 0         # (D, 3D)
OFF_WO = 32          # (D, D)
OFF_W1 = 64          # (D, FF)
OFF_W2 = 96          # (FF, D)
OFF_VEC = 224        # 8 rows: bqkv, bo, g1, be1, b1, b2, g2, be2
LAYER_STRIDE = 232
TOTAL_ROWS = LAYER_R + NUM_LAYERS * LAYER_STRIDE   # 520


# ---------------------------------------------------------------------------
# kernel helpers
# ---------------------------------------------------------------------------
def _layer_norm(x, g, b):
    mu = jnp.mean(x, axis=-1, keepdims=True)
    xc = x - mu
    var = jnp.mean(xc * xc, axis=-1, keepdims=True)   # biased var, like PyTorch
    return xc * jax.lax.rsqrt(var + EPS) * g + b


# ---------------------------------------------------------------------------
# single fused kernel: embed + PE -> N encoder layers -> last pos -> decoder
# ---------------------------------------------------------------------------
def fused_transformer_kernel(x_ref, slab_ref, o_ref):
    B, S, I = x_ref.shape
    BS = B * S
    D = D_MODEL

    # ---- shared params: one header load + two aligned block loads ----
    hdr = slab_ref[HDR_R:HDR_R + 8, :]                      # (8, 128)
    emb_w = hdr[0:INPUT_SIZE, :D]                           # (I, D)
    dec_b = hdr[HDR_DECB:HDR_DECB + 1, :OUTPUT_SIZE]        # (1, OUT)
    sel = hdr[HDR_SEL:HDR_SEL + B, :BS]                     # (B, BS)
    dec_w = slab_ref[DECW_R:DECW_R + D, :OUTPUT_SIZE]       # (D, OUT)
    pe = slab_ref[PE_R:PE_R + BS, :D]                       # (BS, D), emb_b folded in

    # ---- embedding Linear + positional encoding (dropout = identity) ----
    x2 = x_ref[...].reshape(BS, I)
    h = jnp.dot(x2, emb_w, preferred_element_type=jnp.float32) + pe     # (BS, D)

    # ---- encoder layers (post-norm, relu FFN); activations stay (BS, D) ----
    for l in range(NUM_LAYERS):
        base = LAYER_R + l * LAYER_STRIDE
        wqkv = slab_ref[base + OFF_WQKV:base + OFF_WQKV + D, :3 * D]    # (D, 3D)
        wo = slab_ref[base + OFF_WO:base + OFF_WO + D, :D]              # (D, D)
        w1 = slab_ref[base + OFF_W1:base + OFF_W1 + D, :FF]             # (D, FF)
        w2 = slab_ref[base + OFF_W2:base + OFF_W2 + FF, :D]             # (FF, D)
        vecs = slab_ref[base + OFF_VEC:base + OFF_VEC + 8, :]           # (8, 128)
        bqkv = vecs[0:1, :3 * D]
        bo = vecs[1:2, :D]
        g1 = vecs[2:3, :D]
        be1 = vecs[3:4, :D]
        b1 = vecs[4:5, :FF]
        b2 = vecs[5:6, :D]
        g2 = vecs[6:7, :D]
        be2 = vecs[7:8, :D]

        # fused QKV projection: one lane-dense (BS, D) @ (D, 3D) matmul
        qkv = (jnp.dot(h, wqkv, preferred_element_type=jnp.float32) + bqkv
               ).reshape(B, S, 3 * D)                                   # (B, S, 3D)

        # scaled dot-product attention (no mask), batch-B einsums, 4 heads unrolled
        ctx_heads = []
        for hh in range(NHEAD):
            q = qkv[:, :, hh * DH:(hh + 1) * DH]                        # (B, S, Dh)
            k = qkv[:, :, D + hh * DH:D + (hh + 1) * DH]
            v = qkv[:, :, 2 * D + hh * DH:2 * D + (hh + 1) * DH]
            s = jnp.einsum("bsd,btd->bst", q, k,
                           preferred_element_type=jnp.float32) * SCALE  # (B, S, S)
            s = s - jnp.max(s, axis=-1, keepdims=True)
            p = jnp.exp(s)
            p = p / jnp.sum(p, axis=-1, keepdims=True)                  # exact softmax
            ctx_heads.append(jnp.einsum("bst,btd->bsd", p, v,
                                        preferred_element_type=jnp.float32))
        # concat heads back onto lanes -> (BS, D); single output-projection matmul
        ctx = jnp.concatenate(ctx_heads, axis=-1).reshape(BS, D)
        attn = jnp.dot(ctx, wo, preferred_element_type=jnp.float32) + bo

        # residual + LayerNorm1 (dropout identity)
        y = _layer_norm(h + attn, g1, be1)

        # feed-forward: relu(y @ W1 + b1) @ W2 + b2, residual + LayerNorm2
        f = jnp.maximum(
            jnp.dot(y, w1, preferred_element_type=jnp.float32) + b1, 0.0)
        f = jnp.dot(f, w2, preferred_element_type=jnp.float32) + b2
        h = _layer_norm(y + f, g2, be2)

    # ---- last seq position (lane-dense gather-by-matmul) + decoder Linear ----
    last = jnp.dot(sel, h, preferred_element_type=jnp.float32)          # (B, D)
    out = jnp.dot(last, dec_w, preferred_element_type=jnp.float32) + dec_b
    o_ref[...] = out.astype(o_ref.dtype)


# ---------------------------------------------------------------------------
# parameters / positional encoding, packed into one (520, 128) f32 slab
# ---------------------------------------------------------------------------
def positional_encoding(seq, d_model, max_len=5000):
    position = np.arange(max_len, dtype=np.float32)[:, None]
    div_term = np.exp(np.arange(0, d_model, 2, dtype=np.float32)
                      * (-np.log(10000.0) / d_model))
    pe = np.zeros((max_len, d_model), dtype=np.float32)
    pe[:, 0::2] = np.sin(position * div_term)
    pe[:, 1::2] = np.cos(position * div_term)
    return pe[:seq]                                 # (seq, d_model)


def init_params(key):
    keys = iter(jax.random.split(key, 4 + NUM_LAYERS * 10))

    def nrm(shape, scale=0.05):
        return np.asarray(scale * jax.random.normal(next(keys), shape),
                          dtype=np.float32)

    slab = np.zeros((TOTAL_ROWS, LANES), dtype=np.float32)

    def put(row, arr):
        arr = np.asarray(arr, dtype=np.float32)
        slab[row:row + arr.shape[0], :arr.shape[1]] = arr

    # --- shared header / decoder / positional encoding ---
    emb_w = nrm((INPUT_SIZE, D_MODEL))              # pre-transposed: x @ W
    emb_b = nrm((1, D_MODEL))
    dec_w = nrm((D_MODEL, OUTPUT_SIZE))
    dec_b = nrm((1, OUTPUT_SIZE))
    sel = np.zeros((BATCH, BATCH * SEQ), dtype=np.float32)
    sel[np.arange(BATCH), np.arange(BATCH) * SEQ + SEQ - 1] = 1.0

    put(HDR_R, emb_w)
    put(HDR_R + HDR_DECB, dec_b)
    put(HDR_R + HDR_SEL, sel)
    put(DECW_R, dec_w)
    # PE tiled over batch, embedding bias folded in (saves a VPU add + a DMA)
    put(PE_R, np.tile(positional_encoding(SEQ, D_MODEL), (BATCH, 1)) + emb_b)

    # --- per-layer blocks (lane-dense, no head-major packing, no replication) ---
    for l in range(NUM_LAYERS):
        base = LAYER_R + l * LAYER_STRIDE
        wqkv = nrm((D_MODEL, 3 * D_MODEL))          # packed [Wq | Wk | Wv], x @ W form
        bqkv = nrm((1, 3 * D_MODEL))
        wo = nrm((D_MODEL, D_MODEL))                # concat-head output projection
        bo = nrm((1, D_MODEL))
        w1 = nrm((D_MODEL, FF)); b1 = nrm((1, FF))
        w2 = nrm((FF, D_MODEL)); b2 = nrm((1, D_MODEL))
        g1 = np.ones((1, D_MODEL), np.float32); be1 = np.zeros((1, D_MODEL), np.float32)
        g2 = np.ones((1, D_MODEL), np.float32); be2 = np.zeros((1, D_MODEL), np.float32)

        put(base + OFF_WQKV, wqkv)
        put(base + OFF_WO, wo)
        put(base + OFF_W1, w1)
        put(base + OFF_W2, w2)
        vec = base + OFF_VEC
        put(vec + 0, bqkv)
        put(vec + 1, bo)
        put(vec + 2, g1)
        put(vec + 3, be1)
        put(vec + 4, b1)
        put(vec + 5, b2)
        put(vec + 6, g2)
        put(vec + 7, be2)

    return jnp.asarray(slab)


# ---------------------------------------------------------------------------
# forward: one pallas_call, 2 inputs (x + packed slab), everything in VMEM
# ---------------------------------------------------------------------------
def transformer_forward(x, slab):
    out = pl.pallas_call(
        fused_transformer_kernel,
        out_shape=jax.ShapeDtypeStruct((x.shape[0], OUTPUT_SIZE), jnp.float32),
        in_specs=[pl.BlockSpec(memory_space=pltpu.MemorySpace.VMEM),
                  pl.BlockSpec(memory_space=pltpu.MemorySpace.VMEM)],
        out_specs=pl.BlockSpec(memory_space=pltpu.MemorySpace.VMEM),
    )(x, slab)
    return out.reshape(-1, HORIZON, 1)


if __name__ == "__main__":
    key = jax.random.PRNGKey(0)
    pkey, xkey = jax.random.split(key)
    slab = init_params(pkey)
    x = jax.random.normal(xkey, (BATCH, SEQ, INPUT_SIZE), dtype=jnp.float32)

    fwd = jax.jit(lambda xx: transformer_forward(xx, slab))
    y = fwd(x)
    jax.block_until_ready(y)
    assert y.shape == (BATCH, HORIZON, 1), y.shape
    assert bool(jnp.all(jnp.isfinite(y)))
    print("KERNEL_OK")
</pallas_src>

<mosaic_0001>
module attributes {stable_mosaic.version = 11 : i64} {
  func.func @fused_transformer_kernel(%arg0: memref<2x8x4xf32, #tpu.memory_space<vmem>>, %arg1: memref<520x128xf32, #tpu.memory_space<vmem>>, %arg2: memref<2x4xf32, #tpu.memory_space<vmem>>) attributes {dimension_semantics = [], scalar_prefetch = 0 : i64, scratch_operands = 0 : i64, tpu.core_type = #tpu.core_type<tc>} {
    %c0 = arith.constant 0 : index
    %c0_0 = arith.constant 0 : index
    %0 = vector.load %arg1[%c0, %c0_0] : memref<520x128xf32, #tpu.memory_space<vmem>>, vector<8x128xf32>
    %1 = vector.extract_strided_slice %0 {offsets = [0, 0], sizes = [4, 32], strides = [1, 1]} : vector<8x128xf32> to vector<4x32xf32>
    %2 = vector.extract_strided_slice %0 {offsets = [4, 0], sizes = [1, 4], strides = [1, 1]} : vector<8x128xf32> to vector<1x4xf32>
    %3 = vector.extract_strided_slice %0 {offsets = [5, 0], sizes = [2, 16], strides = [1, 1]} : vector<8x128xf32> to vector<2x16xf32>
    %c8 = arith.constant 8 : index
    %c0_1 = arith.constant 0 : index
    %4 = vector.load %arg1[%c8, %c0_1] : memref<520x128xf32, #tpu.memory_space<vmem>>, vector<32x4xf32>
    %c40 = arith.constant 40 : index
    %c0_2 = arith.constant 0 : index
    %5 = vector.load %arg1[%c40, %c0_2] : memref<520x128xf32, #tpu.memory_space<vmem>>, vector<16x32xf32>
    %c0_3 = arith.constant 0 : index
    %c0_4 = arith.constant 0 : index
    %c0_5 = arith.constant 0 : index
    %6 = vector.load %arg0[%c0_3, %c0_4, %c0_5] : memref<2x8x4xf32, #tpu.memory_space<vmem>>, vector<2x8x4xf32>
    %7 = vector.shape_cast %6 : vector<2x8x4xf32> to vector<16x4xf32>
    %cst = arith.constant dense<0.000000e+00> : vector<16x32xf32>
    %8 = tpu.matmul %7, %1, %cst {dimension_numbers = #tpu.dot_dimension_numbers<[1], [0], [0], [1], [0, 0, 1, 1], [], []>} : vector<16x4xf32>, vector<4x32xf32>, vector<16x32xf32> -> vector<16x32xf32>
    %9 = arith.addf %8, %5 : vector<16x32xf32>
    %c56 = arith.constant 56 : index
    %c0_6 = arith.constant 0 : index
    %10 = vector.load %arg1[%c56, %c0_6] : memref<520x128xf32, #tpu.memory_space<vmem>>, vector<32x96xf32>
    %c88 = arith.constant 88 : index
    %c0_7 = arith.constant 0 : index
    %11 = vector.load %arg1[%c88, %c0_7] : memref<520x128xf32, #tpu.memory_space<vmem>>, vector<32x32xf32>
    %c120 = arith.constant 120 : index
    %c0_8 = arith.constant 0 : index
    %12 = vector.load %arg1[%c120, %c0_8] : memref<520x128xf32, #tpu.memory_space<vmem>>, vector<32x128xf32>
    %c152 = arith.constant 152 : index
    %c0_9 = arith.constant 0 : index
    %13 = vector.load %arg1[%c152, %c0_9] : memref<520x128xf32, #tpu.memory_space<vmem>>, vector<128x32xf32>
    %c280 = arith.constant 280 : index
    %c0_10 = arith.constant 0 : index
    %14 = vector.load %arg1[%c280, %c0_10] : memref<520x128xf32, #tpu.memory_space<vmem>>, vector<8x128xf32>
    %15 = vector.extract_strided_slice %14 {offsets = [0, 0], sizes = [1, 96], strides = [1, 1]} : vector<8x128xf32> to vector<1x96xf32>
    %16 = vector.extract_strided_slice %14 {offsets = [1, 0], sizes = [1, 32], strides = [1, 1]} : vector<8x128xf32> to vector<1x32xf32>
    %17 = vector.extract_strided_slice %14 {offsets = [2, 0], sizes = [1, 32], strides = [1, 1]} : vector<8x128xf32> to vector<1x32xf32>
    %18 = vector.extract_strided_slice %14 {offsets = [3, 0], sizes = [1, 32], strides = [1, 1]} : vector<8x128xf32> to vector<1x32xf32>
    %19 = vector.extract_strided_slice %14 {offsets = [4, 0], sizes = [1, 128], strides = [1, 1]} : vector<8x128xf32> to vector<1x128xf32>
    %20 = vector.extract_strided_slice %14 {offsets = [5, 0], sizes = [1, 32], strides = [1, 1]} : vector<8x128xf32> to vector<1x32xf32>
    %21 = vector.extract_strided_slice %14 {offsets = [6, 0], sizes = [1, 32], strides = [1, 1]} : vector<8x128xf32> to vector<1x32xf32>
    %22 = vector.extract_strided_slice %14 {offsets = [7, 0], sizes = [1, 32], strides = [1, 1]} : vector<8x128xf32> to vector<1x32xf32>
    %cst_11 = arith.constant dense<0.000000e+00> : vector<16x96xf32>
    %23 = tpu.matmul %9, %10, %cst_11 {dimension_numbers = #tpu.dot_dimension_numbers<[1], [0], [0], [1], [0, 0, 1, 1], [], []>} : vector<16x32xf32>, vector<32x96xf32>, vector<16x96xf32> -> vector<16x96xf32>
    %24 = vector.broadcast %15 : vector<1x96xf32> to vector<16x96xf32>
    %25 = arith.addf %23, %24 : vector<16x96xf32>
    %26 = vector.shape_cast %25 : vector<16x96xf32> to vector<2x8x96xf32>
    %27 = vector.extract_strided_slice %26 {offsets = [0, 0, 0], sizes = [2, 8, 8], strides = [1, 1, 1]} : vector<2x8x96xf32> to vector<2x8x8xf32>
    %28 = vector.extract_strided_slice %26 {offsets = [0, 0, 32], sizes = [2, 8, 8], strides = [1, 1, 1]} : vector<2x8x96xf32> to vector<2x8x8xf32>
    %29 = vector.extract_strided_slice %26 {offsets = [0, 0, 64], sizes = [2, 8, 8], strides = [1, 1, 1]} : vector<2x8x96xf32> to vector<2x8x8xf32>
    "tpu.trace_start"() <{level = 10 : i32, message = "bsd,btd->bst"}> : () -> ()
    %cst_12 = arith.constant dense<0.000000e+00> : vector<2x8x8xf32>
    %30 = tpu.matmul %27, %28, %cst_12 {dimension_numbers = #tpu.dot_dimension_numbers<[2], [2], [1], [1], [0, 0, 0, 1, 1, 1], [0], [0]>} : vector<2x8x8xf32>, vector<2x8x8xf32>, vector<2x8x8xf32> -> vector<2x8x8xf32>
    "tpu.trace_stop"() : () -> ()
    %cst_13 = arith.constant 0.353553385 : f32
    %31 = vector.broadcast %cst_13 : f32 to vector<2x8x8xf32>
    %32 = arith.mulf %30, %31 : vector<2x8x8xf32>
    %cst_14 = arith.constant dense<0xFF800000> : vector<2x8xf32>
    %33 = vector.multi_reduction <maximumf>, %32, %cst_14 [2] : vector<2x8x8xf32> to vector<2x8xf32>
    %34 = vector.shape_cast %33 : vector<2x8xf32> to vector<2x8x1xf32>
    %35 = vector.broadcast %34 : vector<2x8x1xf32> to vector<2x8x8xf32>
    %36 = arith.subf %32, %35 : vector<2x8x8xf32>
    %37 = math.exp %36 : vector<2x8x8xf32>
    %cst_15 = arith.constant dense<0.000000e+00> : vector<2x8xf32>
    %38 = vector.multi_reduction <add>, %37, %cst_15 [2] : vector<2x8x8xf32> to vector<2x8xf32>
    %39 = vector.shape_cast %38 : vector<2x8xf32> to vector<2x8x1xf32>
    %40 = vector.broadcast %39 : vector<2x8x1xf32> to vector<2x8x8xf32>
    %41 = arith.divf %37, %40 : vector<2x8x8xf32>
    "tpu.trace_start"() <{level = 10 : i32, message = "bst,btd->bsd"}> : () -> ()
    %cst_16 = arith.constant dense<0.000000e+00> : vector<2x8x8xf32>
    %42 = tpu.matmul %41, %29, %cst_16 {dimension_numbers = #tpu.dot_dimension_numbers<[2], [1], [1], [2], [0, 0, 0, 1, 1, 2], [0], [0]>} : vector<2x8x8xf32>, vector<2x8x8xf32>, vector<2x8x8xf32> -> vector<2x8x8xf32>
    "tpu.trace_stop"() : () -> ()
    %43 = vector.extract_strided_slice %26 {offsets = [0, 0, 8], sizes = [2, 8, 8], strides = [1, 1, 1]} : vector<2x8x96xf32> to vector<2x8x8xf32>
    %44 = vector.extract_strided_slice %26 {offsets = [0, 0, 40], sizes = [2, 8, 8], strides = [1, 1, 1]} : vector<2x8x96xf32> to vector<2x8x8xf32>
    %45 = vector.extract_strided_slice %26 {offsets = [0, 0, 72], sizes = [2, 8, 8], strides = [1, 1, 1]} : vector<2x8x96xf32> to vector<2x8x8xf32>
    "tpu.trace_start"() <{level = 10 : i32, message = "bsd,btd->bst"}> : () -> ()
    %cst_17 = arith.constant dense<0.000000e+00> : vector<2x8x8xf32>
    %46 = tpu.matmul %43, %44, %cst_17 {dimension_numbers = #tpu.dot_dimension_numbers<[2], [2], [1], [1], [0, 0, 0, 1, 1, 1], [0], [0]>} : vector<2x8x8xf32>, vector<2x8x8xf32>, vector<2x8x8xf32> -> vector<2x8x8xf32>
    "tpu.trace_stop"() : () -> ()
    %cst_18 = arith.constant 0.353553385 : f32
    %47 = vector.broadcast %cst_18 : f32 to vector<2x8x8xf32>
    %48 = arith.mulf %46, %47 : vector<2x8x8xf32>
    %cst_19 = arith.constant dense<0xFF800000> : vector<2x8xf32>
    %49 = vector.multi_reduction <maximumf>, %48, %cst_19 [2] : vector<2x8x8xf32> to vector<2x8xf32>
    %50 = vector.shape_cast %49 : vector<2x8xf32> to vector<2x8x1xf32>
    %51 = vector.broadcast %50 : vector<2x8x1xf32> to vector<2x8x8xf32>
    %52 = arith.subf %48, %51 : vector<2x8x8xf32>
    %53 = math.exp %52 : vector<2x8x8xf32>
    %cst_20 = arith.constant dense<0.000000e+00> : vector<2x8xf32>
    %54 = vector.multi_reduction <add>, %53, %cst_20 [2] : vector<2x8x8xf32> to vector<2x8xf32>
    %55 = vector.shape_cast %54 : vector<2x8xf32> to vector<2x8x1xf32>
    %56 = vector.broadcast %55 : vector<2x8x1xf32> to vector<2x8x8xf32>
    %57 = arith.divf %53, %56 : vector<2x8x8xf32>
    "tpu.trace_start"() <{level = 10 : i32, message = "bst,btd->bsd"}> : () -> ()
    %cst_21 = arith.constant dense<0.000000e+00> : vector<2x8x8xf32>
    %58 = tpu.matmul %57, %45, %cst_21 {dimension_numbers = #tpu.dot_dimension_numbers<[2], [1], [1], [2], [0, 0, 0, 1, 1, 2], [0], [0]>} : vector<2x8x8xf32>, vector<2x8x8xf32>, vector<2x8x8xf32> -> vector<2x8x8xf32>
    "tpu.trace_stop"() : () -> ()
    %59 = vector.extract_strided_slice %26 {offsets = [0, 0, 16], sizes = [2, 8, 8], strides = [1, 1, 1]} : vector<2x8x96xf32> to vector<2x8x8xf32>
    %60 = vector.extract_strided_slice %26 {offsets = [0, 0, 48], sizes = [2, 8, 8], strides = [1, 1, 1]} : vector<2x8x96xf32> to vector<2x8x8xf32>
    %61 = vector.extract_strided_slice %26 {offsets = [0, 0, 80], sizes = [2, 8, 8], strides = [1, 1, 1]} : vector<2x8x96xf32> to vector<2x8x8xf32>
    "tpu.trace_start"() <{level = 10 : i32, message = "bsd,btd->bst"}> : () -> ()
    %cst_22 = arith.constant dense<0.000000e+00> : vector<2x8x8xf32>
    %62 = tpu.matmul %59, %60, %cst_22 {dimension_numbers = #tpu.dot_dimension_numbers<[2], [2], [1], [1], [0, 0, 0, 1, 1, 1], [0], [0]>} : vector<2x8x8xf32>, vector<2x8x8xf32>, vector<2x8x8xf32> -> vector<2x8x8xf32>
    "tpu.trace_stop"() : () -> ()
    %cst_23 = arith.constant 0.353553385 : f32
    %63 = vector.broadcast %cst_23 : f32 to vector<2x8x8xf32>
    %64 = arith.mulf %62, %63 : vector<2x8x8xf32>
    %cst_24 = arith.constant dense<0xFF800000> : vector<2x8xf32>
    %65 = vector.multi_reduction <maximumf>, %64, %cst_24 [2] : vector<2x8x8xf32> to vector<2x8xf32>
    %66 = vector.shape_cast %65 : vector<2x8xf32> to vector<2x8x1xf32>
    %67 = vector.broadcast %66 : vector<2x8x1xf32> to vector<2x8x8xf32>
    %68 = arith.subf %64, %67 : vector<2x8x8xf32>
    %69 = math.exp %68 : vector<2x8x8xf32>
    %cst_25 = arith.constant dense<0.000000e+00> : vector<2x8xf32>
    %70 = vector.multi_reduction <add>, %69, %cst_25 [2] : vector<2x8x8xf32> to vector<2x8xf32>
    %71 = vector.shape_cast %70 : vector<2x8xf32> to vector<2x8x1xf32>
    %72 = vector.broadcast %71 : vector<2x8x1xf32> to vector<2x8x8xf32>
    %73 = arith.divf %69, %72 : vector<2x8x8xf32>
    "tpu.trace_start"() <{level = 10 : i32, message = "bst,btd->bsd"}> : () -> ()
    %cst_26 = arith.constant dense<0.000000e+00> : vector<2x8x8xf32>
    %74 = tpu.matmul %73, %61, %cst_26 {dimension_numbers = #tpu.dot_dimension_numbers<[2], [1], [1], [2], [0, 0, 0, 1, 1, 2], [0], [0]>} : vector<2x8x8xf32>, vector<2x8x8xf32>, vector<2x8x8xf32> -> vector<2x8x8xf32>
    "tpu.trace_stop"() : () -> ()
    %75 = vector.extract_strided_slice %26 {offsets = [0, 0, 24], sizes = [2, 8, 8], strides = [1, 1, 1]} : vector<2x8x96xf32> to vector<2x8x8xf32>
    %76 = vector.extract_strided_slice %26 {offsets = [0, 0, 56], sizes = [2, 8, 8], strides = [1, 1, 1]} : vector<2x8x96xf32> to vector<2x8x8xf32>
    %77 = vector.extract_strided_slice %26 {offsets = [0, 0, 88], sizes = [2, 8, 8], strides = [1, 1, 1]} : vector<2x8x96xf32> to vector<2x8x8xf32>
    "tpu.trace_start"() <{level = 10 : i32, message = "bsd,btd->bst"}> : () -> ()
    %cst_27 = arith.constant dense<0.000000e+00> : vector<2x8x8xf32>
    %78 = tpu.matmul %75, %76, %cst_27 {dimension_numbers = #tpu.dot_dimension_numbers<[2], [2], [1], [1], [0, 0, 0, 1, 1, 1], [0], [0]>} : vector<2x8x8xf32>, vector<2x8x8xf32>, vector<2x8x8xf32> -> vector<2x8x8xf32>
    "tpu.trace_stop"() : () -> ()
    %cst_28 = arith.constant 0.353553385 : f32
    %79 = vector.broadcast %cst_28 : f32 to vector<2x8x8xf32>
    %80 = arith.mulf %78, %79 : vector<2x8x8xf32>
    %cst_29 = arith.constant dense<0xFF800000> : vector<2x8xf32>
    %81 = vector.multi_reduction <maximumf>, %80, %cst_29 [2] : vector<2x8x8xf32> to vector<2x8xf32>
    %82 = vector.shape_cast %81 : vector<2x8xf32> to vector<2x8x1xf32>
    %83 = vector.broadcast %82 : vector<2x8x1xf32> to vector<2x8x8xf32>
    %84 = arith.subf %80, %83 : vector<2x8x8xf32>
    %85 = math.exp %84 : vector<2x8x8xf32>
    %cst_30 = arith.constant dense<0.000000e+00> : vector<2x8xf32>
    %86 = vector.multi_reduction <add>, %85, %cst_30 [2] : vector<2x8x8xf32> to vector<2x8xf32>
    %87 = vector.shape_cast %86 : vector<2x8xf32> to vector<2x8x1xf32>
    %88 = vector.broadcast %87 : vector<2x8x1xf32> to vector<2x8x8xf32>
    %89 = arith.divf %85, %88 : vector<2x8x8xf32>
    "tpu.trace_start"() <{level = 10 : i32, message = "bst,btd->bsd"}> : () -> ()
    %cst_31 = arith.constant dense<0.000000e+00> : vector<2x8x8xf32>
    %90 = tpu.matmul %89, %77, %cst_31 {dimension_numbers = #tpu.dot_dimension_numbers<[2], [1], [1], [2], [0, 0, 0, 1, 1, 2], [0], [0]>} : vector<2x8x8xf32>, vector<2x8x8xf32>, vector<2x8x8xf32> -> vector<2x8x8xf32>
    "tpu.trace_stop"() : () -> ()
    %91 = tpu.concatenate %42, %58, %74, %90 in 2 : vector<2x8x8xf32>, vector<2x8x8xf32>, vector<2x8x8xf32>, vector<2x8x8xf32> -> vector<2x8x32xf32>
    %92 = vector.shape_cast %91 : vector<2x8x32xf32> to vector<16x32xf32>
    %cst_32 = arith.constant dense<0.000000e+00> : vector<16x32xf32>
    %93 = tpu.matmul %92, %11, %cst_32 {dimension_numbers = #tpu.dot_dimension_numbers<[1], [0], [0], [1], [0, 0, 1, 1], [], []>} : vector<16x32xf32>, vector<32x32xf32>, vector<16x32xf32> -> vector<16x32xf32>
    %94 = vector.broadcast %16 : vector<1x32xf32> to vector<16x32xf32>
    %95 = arith.addf %93, %94 : vector<16x32xf32>
    %96 = arith.addf %9, %95 : vector<16x32xf32>
    %cst_33 = arith.constant dense<0.000000e+00> : vector<16xf32>
    %97 = vector.multi_reduction <add>, %96, %cst_33 [1] : vector<16x32xf32> to vector<16xf32>
    %98 = vector.shape_cast %97 : vector<16xf32> to vector<16x1xf32>
    %cst_34 = arith.constant 3.200000e+01 : f32
    %99 = vector.broadcast %cst_34 : f32 to vector<16x1xf32>
    %100 = arith.divf %98, %99 : vector<16x1xf32>
    %101 = vector.broadcast %100 : vector<16x1xf32> to vector<16x32xf32>
    %102 = arith.subf %96, %101 : vector<16x32xf32>
    %103 = arith.mulf %102, %102 : vector<16x32xf32>
    %cst_35 = arith.constant dense<0.000000e+00> : vector<16xf32>
    %104 = vector.multi_reduction <add>, %103, %cst_35 [1] : vector<16x32xf32> to vector<16xf32>
    %105 = vector.shape_cast %104 : vector<16xf32> to vector<16x1xf32>
    %cst_36 = arith.constant 3.200000e+01 : f32
    %106 = vector.broadcast %cst_36 : f32 to vector<16x1xf32>
    %107 = arith.divf %105, %106 : vector<16x1xf32>
    %cst_37 = arith.constant 9.99999974E-6 : f32
    %108 = vector.broadcast %cst_37 : f32 to vector<16x1xf32>
    %109 = arith.addf %107, %108 : vector<16x1xf32>
    %110 = math.rsqrt %109 : vector<16x1xf32>
    %111 = vector.broadcast %110 : vector<16x1xf32> to vector<16x32xf32>
    %112 = arith.mulf %102, %111 : vector<16x32xf32>
    %113 = vector.broadcast %17 : vector<1x32xf32> to vector<16x32xf32>
    %114 = arith.mulf %112, %113 : vector<16x32xf32>
    %115 = vector.broadcast %18 : vector<1x32xf32> to vector<16x32xf32>
    %116 = arith.addf %114, %115 : vector<16x32xf32>
    %cst_38 = arith.constant dense<0.000000e+00> : vector<16x128xf32>
    %117 = tpu.matmul %116, %12, %cst_38 {dimension_numbers = #tpu.dot_dimension_numbers<[1], [0], [0], [1], [0, 0, 1, 1], [], []>} : vector<16x32xf32>, vector<32x128xf32>, vector<16x128xf32> -> vector<16x128xf32>
    %118 = vector.broadcast %19 : vector<1x128xf32> to vector<16x128xf32>
    %119 = arith.addf %117, %118 : vector<16x128xf32>
    %cst_39 = arith.constant 0.000000e+00 : f32
    %120 = vector.broadcast %cst_39 : f32 to vector<16x128xf32>
    %121 = arith.maximumf %119, %120 : vector<16x128xf32>
    %cst_40 = arith.constant dense<0.000000e+00> : vector<16x32xf32>
    %122 = tpu.matmul %121, %13, %cst_40 {dimension_numbers = #tpu.dot_dimension_numbers<[1], [0], [0], [1], [0, 0, 1, 1], [], []>} : vector<16x128xf32>, vector<128x32xf32>, vector<16x32xf32> -> vector<16x32xf32>
    %123 = vector.broadcast %20 : vector<1x32xf32> to vector<16x32xf32>
    %124 = arith.addf %122, %123 : vector<16x32xf32>
    %125 = arith.addf %116, %124 : vector<16x32xf32>
    %cst_41 = arith.constant dense<0.000000e+00> : vector<16xf32>
    %126 = vector.multi_reduction <add>, %125, %cst_41 [1] : vector<16x32xf32> to vector<16xf32>
    %127 = vector.shape_cast %126 : vector<16xf32> to vector<16x1xf32>
    %cst_42 = arith.constant 3.200000e+01 : f32
    %128 = vector.broadcast %cst_42 : f32 to vector<16x1xf32>
    %129 = arith.divf %127, %128 : vector<16x1xf32>
    %130 = vector.broadcast %129 : vector<16x1xf32> to vector<16x32xf32>
    %131 = arith.subf %125, %130 : vector<16x32xf32>
    %132 = arith.mulf %131, %131 : vector<16x32xf32>
    %cst_43 = arith.constant dense<0.000000e+00> : vector<16xf32>
    %133 = vector.multi_reduction <add>, %132, %cst_43 [1] : vector<16x32xf32> to vector<16xf32>
    %134 = vector.shape_cast %133 : vector<16xf32> to vector<16x1xf32>
    %cst_44 = arith.constant 3.200000e+01 : f32
    %135 = vector.broadcast %cst_44 : f32 to vector<16x1xf32>
    %136 = arith.divf %134, %135 : vector<16x1xf32>
    %cst_45 = arith.constant 9.99999974E-6 : f32
    %137 = vector.broadcast %cst_45 : f32 to vector<16x1xf32>
    %138 = arith.addf %136, %137 : vector<16x1xf32>
    %139 = math.rsqrt %138 : vector<16x1xf32>
    %140 = vector.broadcast %139 : vector<16x1xf32> to vector<16x32xf32>
    %141 = arith.mulf %131, %140 : vector<16x32xf32>
    %142 = vector.broadcast %21 : vector<1x32xf32> to vector<16x32xf32>
    %143 = arith.mulf %141, %142 : vector<16x32xf32>
    %144 = vector.broadcast %22 : vector<1x32xf32> to vector<16x32xf32>
    %145 = arith.addf %143, %144 : vector<16x32xf32>
    %c288 = arith.constant 288 : index
    %c0_46 = arith.constant 0 : index
    %146 = vector.load %arg1[%c288, %c0_46] : memref<520x128xf32, #tpu.memory_space<vmem>>, vector<32x96xf32>
    %c320 = arith.constant 320 : index
    %c0_47 = arith.constant 0 : index
    %147 = vector.load %arg1[%c320, %c0_47] : memref<520x128xf32, #tpu.memory_space<vmem>>, vector<32x32xf32>
    %c352 = arith.constant 352 : index
    %c0_48 = arith.constant 0 : index
    %148 = vector.load %arg1[%c352, %c0_48] : memref<520x128xf32, #tpu.memory_space<vmem>>, vector<32x128xf32>
    %c384 = arith.constant 384 : index
    %c0_49 = arith.constant 0 : index
    %149 = vector.load %arg1[%c384, %c0_49] : memref<520x128xf32, #tpu.memory_space<vmem>>, vector<128x32xf32>
    %c512 = arith.constant 512 : index
    %c0_50 = arith.constant 0 : index
    %150 = vector.load %arg1[%c512, %c0_50] : memref<520x128xf32, #tpu.memory_space<vmem>>, vector<8x128xf32>
    %151 = vector.extract_strided_slice %150 {offsets = [0, 0], sizes = [1, 96], strides = [1, 1]} : vector<8x128xf32> to vector<1x96xf32>
    %152 = vector.extract_strided_slice %150 {offsets = [1, 0], sizes = [1, 32], strides = [1, 1]} : vector<8x128xf32> to vector<1x32xf32>
    %153 = vector.extract_strided_slice %150 {offsets = [2, 0], sizes = [1, 32], strides = [1, 1]} : vector<8x128xf32> to vector<1x32xf32>
    %154 = vector.extract_strided_slice %150 {offsets = [3, 0], sizes = [1, 32], strides = [1, 1]} : vector<8x128xf32> to vector<1x32xf32>
    %155 = vector.extract_strided_slice %150 {offsets = [4, 0], sizes = [1, 128], strides = [1, 1]} : vector<8x128xf32> to vector<1x128xf32>
    %156 = vector.extract_strided_slice %150 {offsets = [5, 0], sizes = [1, 32], strides = [1, 1]} : vector<8x128xf32> to vector<1x32xf32>
    %157 = vector.extract_strided_slice %150 {offsets = [6, 0], sizes = [1, 32], strides = [1, 1]} : vector<8x128xf32> to vector<1x32xf32>
    %158 = vector.extract_strided_slice %150 {offsets = [7, 0], sizes = [1, 32], strides = [1, 1]} : vector<8x128xf32> to vector<1x32xf32>
    %cst_51 = arith.constant dense<0.000000e+00> : vector<16x96xf32>
    %159 = tpu.matmul %145, %146, %cst_51 {dimension_numbers = #tpu.dot_dimension_numbers<[1], [0], [0], [1], [0, 0, 1, 1], [], []>} : vector<16x32xf32>, vector<32x96xf32>, vector<16x96xf32> -> vector<16x96xf32>
    %160 = vector.broadcast %151 : vector<1x96xf32> to vector<16x96xf32>
    %161 = arith.addf %159, %160 : vector<16x96xf32>
    %162 = vector.shape_cast %161 : vector<16x96xf32> to vector<2x8x96xf32>
    %163 = vector.extract_strided_slice %162 {offsets = [0, 0, 0], sizes = [2, 8, 8], strides = [1, 1, 1]} : vector<2x8x96xf32> to vector<2x8x8xf32>
    %164 = vector.extract_strided_slice %162 {offsets = [0, 0, 32], sizes = [2, 8, 8], strides = [1, 1, 1]} : vector<2x8x96xf32> to vector<2x8x8xf32>
    %165 = vector.extract_strided_slice %162 {offsets = [0, 0, 64], sizes = [2, 8, 8], strides = [1, 1, 1]} : vector<2x8x96xf32> to vector<2x8x8xf32>
    "tpu.trace_start"() <{level = 10 : i32, message = "bsd,btd->bst"}> : () -> ()
    %cst_52 = arith.constant dense<0.000000e+00> : vector<2x8x8xf32>
    %166 = tpu.matmul %163, %164, %cst_52 {dimension_numbers = #tpu.dot_dimension_numbers<[2], [2], [1], [1], [0, 0, 0, 1, 1, 1], [0], [0]>} : vector<2x8x8xf32>, vector<2x8x8xf32>, vector<2x8x8xf32> -> vector<2x8x8xf32>
    "tpu.trace_stop"() : () -> ()
    %cst_53 = arith.constant 0.353553385 : f32
    %167 = vector.broadcast %cst_53 : f32 to vector<2x8x8xf32>
    %168 = arith.mulf %166, %167 : vector<2x8x8xf32>
    %cst_54 = arith.constant dense<0xFF800000> : vector<2x8xf32>
    %169 = vector.multi_reduction <maximumf>, %168, %cst_54 [2] : vector<2x8x8xf32> to vector<2x8xf32>
    %170 = vector.shape_cast %169 : vector<2x8xf32> to vector<2x8x1xf32>
    %171 = vector.broadcast %170 : vector<2x8x1xf32> to vector<2x8x8xf32>
    %172 = arith.subf %168, %171 : vector<2x8x8xf32>
    %173 = math.exp %172 : vector<2x8x8xf32>
    %cst_55 = arith.constant dense<0.000000e+00> : vector<2x8xf32>
    %174 = vector.multi_reduction <add>, %173, %cst_55 [2] : vector<2x8x8xf32> to vector<2x8xf32>
    %175 = vector.shape_cast %174 : vector<2x8xf32> to vector<2x8x1xf32>
    %176 = vector.broadcast %175 : vector<2x8x1xf32> to vector<2x8x8xf32>
    %177 = arith.divf %173, %176 : vector<2x8x8xf32>
    "tpu.trace_start"() <{level = 10 : i32, message = "bst,btd->bsd"}> : () -> ()
    %cst_56 = arith.constant dense<0.000000e+00> : vector<2x8x8xf32>
    %178 = tpu.matmul %177, %165, %cst_56 {dimension_numbers = #tpu.dot_dimension_numbers<[2], [1], [1], [2], [0, 0, 0, 1, 1, 2], [0], [0]>} : vector<2x8x8xf32>, vector<2x8x8xf32>, vector<2x8x8xf32> -> vector<2x8x8xf32>
    "tpu.trace_stop"() : () -> ()
    %179 = vector.extract_strided_slice %162 {offsets = [0, 0, 8], sizes = [2, 8, 8], strides = [1, 1, 1]} : vector<2x8x96xf32> to vector<2x8x8xf32>
    %180 = vector.extract_strided_slice %162 {offsets = [0, 0, 40], sizes = [2, 8, 8], strides = [1, 1, 1]} : vector<2x8x96xf32> to vector<2x8x8xf32>
    %181 = vector.extract_strided_slice %162 {offsets = [0, 0, 72], sizes = [2, 8, 8], strides = [1, 1, 1]} : vector<2x8x96xf32> to vector<2x8x8xf32>
    "tpu.trace_start"() <{level = 10 : i32, message = "bsd,btd->bst"}> : () -> ()
    %cst_57 = arith.constant dense<0.000000e+00> : vector<2x8x8xf32>
    %182 = tpu.matmul %179, %180, %cst_57 {dimension_numbers = #tpu.dot_dimension_numbers<[2], [2], [1], [1], [0, 0, 0, 1, 1, 1], [0], [0]>} : vector<2x8x8xf32>, vector<2x8x8xf32>, vector<2x8x8xf32> -> vector<2x8x8xf32>
    "tpu.trace_stop"() : () -> ()
    %cst_58 = arith.constant 0.353553385 : f32
    %183 = vector.broadcast %cst_58 : f32 to vector<2x8x8xf32>
    %184 = arith.mulf %182, %183 : vector<2x8x8xf32>
    %cst_59 = arith.constant dense<0xFF800000> : vector<2x8xf32>
    %185 = vector.multi_reduction <maximumf>, %184, %cst_59 [2] : vector<2x8x8xf32> to vector<2x8xf32>
    %186 = vector.shape_cast %185 : vector<2x8xf32> to vector<2x8x1xf32>
    %187 = vector.broadcast %186 : vector<2x8x1xf32> to vector<2x8x8xf32>
    %188 = arith.subf %184, %187 : vector<2x8x8xf32>
    %189 = math.exp %188 : vector<2x8x8xf32>
    %cst_60 = arith.constant dense<0.000000e+00> : vector<2x8xf32>
    %190 = vector.multi_reduction <add>, %189, %cst_60 [2] : vector<2x8x8xf32> to vector<2x8xf32>
    %191 = vector.shape_cast %190 : vector<2x8xf32> to vector<2x8x1xf32>
    %192 = vector.broadcast %191 : vector<2x8x1xf32> to vector<2x8x8xf32>
    %193 = arith.divf %189, %192 : vector<2x8x8xf32>
    "tpu.trace_start"() <{level = 10 : i32, message = "bst,btd->bsd"}> : () -> ()
    %cst_61 = arith.constant dense<0.000000e+00> : vector<2x8x8xf32>
    %194 = tpu.matmul %193, %181, %cst_61 {dimension_numbers = #tpu.dot_dimension_numbers<[2], [1], [1], [2], [0, 0, 0, 1, 1, 2], [0], [0]>} : vector<2x8x8xf32>, vector<2x8x8xf32>, vector<2x8x8xf32> -> vector<2x8x8xf32>
    "tpu.trace_stop"() : () -> ()
    %195 = vector.extract_strided_slice %162 {offsets = [0, 0, 16], sizes = [2, 8, 8], strides = [1, 1, 1]} : vector<2x8x96xf32> to vector<2x8x8xf32>
    %196 = vector.extract_strided_slice %162 {offsets = [0, 0, 48], sizes = [2, 8, 8], strides = [1, 1, 1]} : vector<2x8x96xf32> to vector<2x8x8xf32>
    %197 = vector.extract_strided_slice %162 {offsets = [0, 0, 80], sizes = [2, 8, 8], strides = [1, 1, 1]} : vector<2x8x96xf32> to vector<2x8x8xf32>
    "tpu.trace_start"() <{level = 10 : i32, message = "bsd,btd->bst"}> : () -> ()
    %cst_62 = arith.constant dense<0.000000e+00> : vector<2x8x8xf32>
    %198 = tpu.matmul %195, %196, %cst_62 {dimension_numbers = #tpu.dot_dimension_numbers<[2], [2], [1], [1], [0, 0, 0, 1, 1, 1], [0], [0]>} : vector<2x8x8xf32>, vector<2x8x8xf32>, vector<2x8x8xf32> -> vector<2x8x8xf32>
    "tpu.trace_stop"() : () -> ()
    %cst_63 = arith.constant 0.353553385 : f32
    %199 = vector.broadcast %cst_63 : f32 to vector<2x8x8xf32>
    %200 = arith.mulf %198, %199 : vector<2x8x8xf32>
    %cst_64 = arith.constant dense<0xFF800000> : vector<2x8xf32>
    %201 = vector.multi_reduction <maximumf>, %200, %cst_64 [2] : vector<2x8x8xf32> to vector<2x8xf32>
    %202 = vector.shape_cast %201 : vector<2x8xf32> to vector<2x8x1xf32>
    %203 = vector.broadcast %202 : vector<2x8x1xf32> to vector<2x8x8xf32>
    %204 = arith.subf %200, %203 : vector<2x8x8xf32>
    %205 = math.exp %204 : vector<2x8x8xf32>
    %cst_65 = arith.constant dense<0.000000e+00> : vector<2x8xf32>
    %206 = vector.multi_reduction <add>, %205, %cst_65 [2] : vector<2x8x8xf32> to vector<2x8xf32>
    %207 = vector.shape_cast %206 : vector<2x8xf32> to vector<2x8x1xf32>
    %208 = vector.broadcast %207 : vector<2x8x1xf32> to vector<2x8x8xf32>
    %209 = arith.divf %205, %208 : vector<2x8x8xf32>
    "tpu.trace_start"() <{level = 10 : i32, message = "bst,btd->bsd"}> : () -> ()
    %cst_66 = arith.constant dense<0.000000e+00> : vector<2x8x8xf32>
    %210 = tpu.matmul %209, %197, %cst_66 {dimension_numbers = #tpu.dot_dimension_numbers<[2], [1], [1], [2], [0, 0, 0, 1, 1, 2], [0], [0]>} : vector<2x8x8xf32>, vector<2x8x8xf32>, vector<2x8x8xf32> -> vector<2x8x8xf32>
    "tpu.trace_stop"() : () -> ()
    %211 = vector.extract_strided_slice %162 {offsets = [0, 0, 24], sizes = [2, 8, 8], strides = [1, 1, 1]} : vector<2x8x96xf32> to vector<2x8x8xf32>
    %212 = vector.extract_strided_slice %162 {offsets = [0, 0, 56], sizes = [2, 8, 8], strides = [1, 1, 1]} : vector<2x8x96xf32> to vector<2x8x8xf32>
    %213 = vector.extract_strided_slice %162 {offsets = [0, 0, 88], sizes = [2, 8, 8], strides = [1, 1, 1]} : vector<2x8x96xf32> to vector<2x8x8xf32>
    "tpu.trace_start"() <{level = 10 : i32, message = "bsd,btd->bst"}> : () -> ()
    %cst_67 = arith.constant dense<0.000000e+00> : vector<2x8x8xf32>
    %214 = tpu.matmul %211, %212, %cst_67 {dimension_numbers = #tpu.dot_dimension_numbers<[2], [2], [1], [1], [0, 0, 0, 1, 1, 1], [0], [0]>} : vector<2x8x8xf32>, vector<2x8x8xf32>, vector<2x8x8xf32> -> vector<2x8x8xf32>
    "tpu.trace_stop"() : () -> ()
    %cst_68 = arith.constant 0.353553385 : f32
    %215 = vector.broadcast %cst_68 : f32 to vector<2x8x8xf32>
    %216 = arith.mulf %214, %215 : vector<2x8x8xf32>
    %cst_69 = arith.constant dense<0xFF800000> : vector<2x8xf32>
    %217 = vector.multi_reduction <maximumf>, %216, %cst_69 [2] : vector<2x8x8xf32> to vector<2x8xf32>
    %218 = vector.shape_cast %217 : vector<2x8xf32> to vector<2x8x1xf32>
    %219 = vector.broadcast %218 : vector<2x8x1xf32> to vector<2x8x8xf32>
    %220 = arith.subf %216, %219 : vector<2x8x8xf32>
    %221 = math.exp %220 : vector<2x8x8xf32>
    %cst_70 = arith.constant dense<0.000000e+00> : vector<2x8xf32>
    %222 = vector.multi_reduction <add>, %221, %cst_70 [2] : vector<2x8x8xf32> to vector<2x8xf32>
    %223 = vector.shape_cast %222 : vector<2x8xf32> to vector<2x8x1xf32>
    %224 = vector.broadcast %223 : vector<2x8x1xf32> to vector<2x8x8xf32>
    %225 = arith.divf %221, %224 : vector<2x8x8xf32>
    "tpu.trace_start"() <{level = 10 : i32, message = "bst,btd->bsd"}> : () -> ()
    %cst_71 = arith.constant dense<0.000000e+00> : vector<2x8x8xf32>
    %226 = tpu.matmul %225, %213, %cst_71 {dimension_numbers = #tpu.dot_dimension_numbers<[2], [1], [1], [2], [0, 0, 0, 1, 1, 2], [0], [0]>} : vector<2x8x8xf32>, vector<2x8x8xf32>, vector<2x8x8xf32> -> vector<2x8x8xf32>
    "tpu.trace_stop"() : () -> ()
    %227 = tpu.concatenate %178, %194, %210, %226 in 2 : vector<2x8x8xf32>, vector<2x8x8xf32>, vector<2x8x8xf32>, vector<2x8x8xf32> -> vector<2x8x32xf32>
    %228 = vector.shape_cast %227 : vector<2x8x32xf32> to vector<16x32xf32>
    %cst_72 = arith.constant dense<0.000000e+00> : vector<16x32xf32>
    %229 = tpu.matmul %228, %147, %cst_72 {dimension_numbers = #tpu.dot_dimension_numbers<[1], [0], [0], [1], [0, 0, 1, 1], [], []>} : vector<16x32xf32>, vector<32x32xf32>, vector<16x32xf32> -> vector<16x32xf32>
    %230 = vector.broadcast %152 : vector<1x32xf32> to vector<16x32xf32>
    %231 = arith.addf %229, %230 : vector<16x32xf32>
    %232 = arith.addf %145, %231 : vector<16x32xf32>
    %cst_73 = arith.constant dense<0.000000e+00> : vector<16xf32>
    %233 = vector.multi_reduction <add>, %232, %cst_73 [1] : vector<16x32xf32> to vector<16xf32>
    %234 = vector.shape_cast %233 : vector<16xf32> to vector<16x1xf32>
    %cst_74 = arith.constant 3.200000e+01 : f32
    %235 = vector.broadcast %cst_74 : f32 to vector<16x1xf32>
    %236 = arith.divf %234, %235 : vector<16x1xf32>
    %237 = vector.broadcast %236 : vector<16x1xf32> to vector<16x32xf32>
    %238 = arith.subf %232, %237 : vector<16x32xf32>
    %239 = arith.mulf %238, %238 : vector<16x32xf32>
    %cst_75 = arith.constant dense<0.000000e+00> : vector<16xf32>
    %240 = vector.multi_reduction <add>, %239, %cst_75 [1] : vector<16x32xf32> to vector<16xf32>
    %241 = vector.shape_cast %240 : vector<16xf32> to vector<16x1xf32>
    %cst_76 = arith.constant 3.200000e+01 : f32
    %242 = vector.broadcast %cst_76 : f32 to vector<16x1xf32>
    %243 = arith.divf %241, %242 : vector<16x1xf32>
    %cst_77 = arith.constant 9.99999974E-6 : f32
    %244 = vector.broadcast %cst_77 : f32 to vector<16x1xf32>
    %245 = arith.addf %243, %244 : vector<16x1xf32>
    %246 = math.rsqrt %245 : vector<16x1xf32>
    %247 = vector.broadcast %246 : vector<16x1xf32> to vector<16x32xf32>
    %248 = arith.mulf %238, %247 : vector<16x32xf32>
    %249 = vector.broadcast %153 : vector<1x32xf32> to vector<16x32xf32>
    %250 = arith.mulf %248, %249 : vector<16x32xf32>
    %251 = vector.broadcast %154 : vector<1x32xf32> to vector<16x32xf32>
    %252 = arith.addf %250, %251 : vector<16x32xf32>
    %cst_78 = arith.constant dense<0.000000e+00> : vector<16x128xf32>
    %253 = tpu.matmul %252, %148, %cst_78 {dimension_numbers = #tpu.dot_dimension_numbers<[1], [0], [0], [1], [0, 0, 1, 1], [], []>} : vector<16x32xf32>, vector<32x128xf32>, vector<16x128xf32> -> vector<16x128xf32>
    %254 = vector.broadcast %155 : vector<1x128xf32> to vector<16x128xf32>
    %255 = arith.addf %253, %254 : vector<16x128xf32>
    %cst_79 = arith.constant 0.000000e+00 : f32
    %256 = vector.broadcast %cst_79 : f32 to vector<16x128xf32>
    %257 = arith.maximumf %255, %256 : vector<16x128xf32>
    %cst_80 = arith.constant dense<0.000000e+00> : vector<16x32xf32>
    %258 = tpu.matmul %257, %149, %cst_80 {dimension_numbers = #tpu.dot_dimension_numbers<[1], [0], [0], [1], [0, 0, 1, 1], [], []>} : vector<16x128xf32>, vector<128x32xf32>, vector<16x32xf32> -> vector<16x32xf32>
    %259 = vector.broadcast %156 : vector<1x32xf32> to vector<16x32xf32>
    %260 = arith.addf %258, %259 : vector<16x32xf32>
    %261 = arith.addf %252, %260 : vector<16x32xf32>
    %cst_81 = arith.constant dense<0.000000e+00> : vector<16xf32>
    %262 = vector.multi_reduction <add>, %261, %cst_81 [1] : vector<16x32xf32> to vector<16xf32>
    %263 = vector.shape_cast %262 : vector<16xf32> to vector<16x1xf32>
    %cst_82 = arith.constant 3.200000e+01 : f32
    %264 = vector.broadcast %cst_82 : f32 to vector<16x1xf32>
    %265 = arith.divf %263, %264 : vector<16x1xf32>
    %266 = vector.broadcast %265 : vector<16x1xf32> to vector<16x32xf32>
    %267 = arith.subf %261, %266 : vector<16x32xf32>
    %268 = arith.mulf %267, %267 : vector<16x32xf32>
    %cst_83 = arith.constant dense<0.000000e+00> : vector<16xf32>
    %269 = vector.multi_reduction <add>, %268, %cst_83 [1] : vector<16x32xf32> to vector<16xf32>
    %270 = vector.shape_cast %269 : vector<16xf32> to vector<16x1xf32>
    %cst_84 = arith.constant 3.200000e+01 : f32
    %271 = vector.broadcast %cst_84 : f32 to vector<16x1xf32>
    %272 = arith.divf %270, %271 : vector<16x1xf32>
    %cst_85 = arith.constant 9.99999974E-6 : f32
    %273 = vector.broadcast %cst_85 : f32 to vector<16x1xf32>
    %274 = arith.addf %272, %273 : vector<16x1xf32>
    %275 = math.rsqrt %274 : vector<16x1xf32>
    %276 = vector.broadcast %275 : vector<16x1xf32> to vector<16x32xf32>
    %277 = arith.mulf %267, %276 : vector<16x32xf32>
    %278 = vector.broadcast %157 : vector<1x32xf32> to vector<16x32xf32>
    %279 = arith.mulf %277, %278 : vector<16x32xf32>
    %280 = vector.broadcast %158 : vector<1x32xf32> to vector<16x32xf32>
    %281 = arith.addf %279, %280 : vector<16x32xf32>
    %cst_86 = arith.constant dense<0.000000e+00> : vector<2x32xf32>
    %282 = tpu.matmul %3, %281, %cst_86 {dimension_numbers = #tpu.dot_dimension_numbers<[1], [0], [0], [1], [0, 0, 1, 1], [], []>} : vector<2x16xf32>, vector<16x32xf32>, vector<2x32xf32> -> vector<2x32xf32>
    %cst_87 = arith.constant dense<0.000000e+00> : vector<2x4xf32>
    %283 = tpu.matmul %282, %4, %cst_87 {dimension_numbers = #tpu.dot_dimension_numbers<[1], [0], [0], [1], [0, 0, 1, 1], [], []>} : vector<2x32xf32>, vector<32x4xf32>, vector<2x4xf32> -> vector<2x4xf32>
    %284 = vector.broadcast %2 : vector<1x4xf32> to vector<2x4xf32>
    %285 = arith.addf %283, %284 : vector<2x4xf32>
    %c0_88 = arith.constant 0 : index
    %c0_89 = arith.constant 0 : index
    %286 = vector.load %arg2[%c0_88, %c0_89] : memref<2x4xf32, #tpu.memory_space<vmem>>, vector<2x4xf32>
    tpu.vector_store %arg2[%c0_88, %c0_89], %285 {strides = array<i32>} : memref<2x4xf32, #tpu.memory_space<vmem>>, vector<2x4xf32>,
    return
  }
}

</mosaic_0001>

<llo_original>
// kernel: _lambda_.1
$region0: #{_lambda_.1}
  #allocation0 [shape = 'u32[]', space=smem, size = 0x4, offset = 0x4, fixed_abs, tag = 'smem constant byte address 0x4 - core index']
  #allocation1 [shape = 'u32[72,128]{1,0:T(1,128)}', space=vmem, size = 0x9000, scoped, tag = 'internal scratch']
  %s0 = inlined_call_operand.vmem [shape: f32[2,8,4], index: 0, kind: input, shape index: {}]
  %s1 = inlined_call_operand.hbm [shape: f32[520,128], index: 1, kind: input, shape index: {}]
  %s2 = inlined_call_operand.hbm [shape: f32[2,4], index: 2, kind: output, shape index: {}]
  %s3 = sld [smem:[#allocation0]]
  $region22: #{_lambda_.1} parent=0
    _
  %s5 = ssub.s32 1, %s3
  %s6 = scalar_select 0, %s5, %s3
  $region1: #{_lambda_.1} parent=0
    #allocation2 [shape = 'u8[266240]{0}', space=vmem, size = 0x41000, scoped, tag = 'input window, operand 1, single buffered']
    #allocation3 [shape = 's32[1]{0}', space=sflag, size = 0x4, scoped, tag = 'scoped memory for _lambda_.1']
    #allocation4 [shape = 's32[1]{0}', space=sflag, size = 0x4, scoped, tag = 'scoped memory for _lambda_.1']
    #allocation5 [shape = 'u8[1024]{0}', space=vmem, size = 0x400, scoped, tag = 'output window, operand 0, single buffered']
    %7 = vsyncpa [#allocation3], 0
    %8 = vsyncpa [#allocation4], 0
    // Predicated region
    $region2: #{_lambda_.1} parent=1 // pred_check
      _
    $region3: #{_lambda_.1} parent=1 // pred_check_branch
      %10 = sbr.rel (0) target = $region5
    $region4: #{_lambda_.1} parent=1 // pred_region
      _
    $region5: #{_lambda_.1} parent=1 // pred_fallthru
      _
    // Predicated region
    $region6: #{_lambda_.1} parent=1 // pred_check
      _
    $region7: #{_lambda_.1} parent=1 // pred_check_branch
      %12 = sbr.rel (0) target = $region9
    $region8: #{_lambda_.1} parent=1 // pred_region
      %14 = vsyncadd [#allocation3], 0
      %s15 = sshll.u32 %s1, 4
      %s16 = int_to_ptr.hbm [resolvable:$true] %s15
      %s17 = sshll.u32 [#allocation2], 4
      %s18 = int_to_ptr.vmem [resolvable:$true] %s17
      %23 = dma.hbm_to_vmem [thread:$0]  %s16, 8320, %s18, [#allocation3], 128, 128, 8
    $region9: #{_lambda_.1} parent=1 // pred_fallthru
      _
    // Predicated region
    $region10: #{_lambda_.1} parent=1 // pred_check
      _
    $region11: #{_lambda_.1} parent=1 // pred_check_branch
      %25 = sbr.rel (0) target = $region13
    $region12: #{_lambda_.1} parent=1 // pred_region
      %27 = dma.done [#allocation3], 8320
    $region13: #{_lambda_.1} parent=1 // pred_fallthru
      _
    %v28 = vld [vmem:[#allocation2] sm:$0xff]
    %v29 = vld [vmem:[#allocation2 + $0x8] sm:$0xff]
    %v30 = vld [vmem:[#allocation2 + $0x10] sm:$0xff]
    %v31 = vld [vmem:[#allocation2 + $0x18] sm:$0xff]
    %v32 = vld [vmem:[#allocation2 + $0x20] sm:$0xff]
    %v33 = vld [vmem:[#allocation2 + $0x28] sm:$0xff]
    %v34 = vld [vmem:[#allocation2 + $0x30] sm:$0xff]
    %v35 = vld [vmem:[%s0] sm:$0xff]
    %v36 = vld [vmem:[%s0 + $0x8] sm:$0xff]
    %vm37 = vcmask 31744
    %v39 = vsel %vm37, %v35, 0
    %v42 = vsel %vm37, %v36, 0
    %vm44 = vcmask 1043456
    %v46 = vsel %vm44, %v28, 0
    %48 = vmatpush.msra.mxu0 0.0
    %49 = vmatpush.msra.mxu0 0.0
    %50 = vmatpush.msra.mxu0 0.0
    %51 = vmatpush.msra.mxu0 0.0
    %52 = vmatpush.msra.mxu0 0.0
    %53 = vmatpush.msra.mxu0 0.0
    %54 = vmatpush.msra.mxu0 0.0
    %55 = vmatpush.msra.mxu0 0.0
    %56 = vmatpush.msra.mxu0 0.0
    %57 = vmatpush.msra.mxu0 0.0
    %58 = vmatpush.msra.mxu0 0.0
    %59 = vmatpush.msra.mxu0 0.0
    %60 = vmatpush.msra.mxu0 0.0
    %61 = vmatpush.msra.mxu0 0.0
    %62 = vmatpush.msra.mxu0 0.0
    %63 = vmatpush.msra.mxu0 %v46
    %64 = vmatmul.f32.gmra.mxu0 %v39
    %v65 = vpop.f32.mrf.mxu0
    %v66 = vadd.f32 %v33, %v65
    %67 = vmatmul.f32.gmra.mxu0 %v42
    %v68 = vpop.f32.mrf.mxu0
    %v69 = vadd.f32 %v34, %v68
    %70 = vdwg.mxu0
    %v71 = vld [vmem:[#allocation2 + $0x38] sm:$0xff]
    %v72 = vld [vmem:[#allocation2 + $0x40] sm:$0xff]
    %v73 = vld [vmem:[#allocation2 + $0x48] sm:$0xff]
    %v74 = vld [vmem:[#allocation2 + $0x50] sm:$0xff]
    %v75 = vld [vmem:[#allocation2 + $0x58] sm:$0xff]
    %v76 = vld [vmem:[#allocation2 + $0x60] sm:$0xff]
    %v77 = vld [vmem:[#allocation2 + $0x68] sm:$0xff]
    %v78 = vld [vmem:[#allocation2 + $0x70] sm:$0xff]
    %v79 = vld [vmem:[#allocation2 + $0x78] sm:$0xff]
    %v80 = vld [vmem:[#allocation2 + $0x80] sm:$0xff]
    %v81 = vld [vmem:[#allocation2 + $0x88] sm:$0xff]
    %v82 = vld [vmem:[#allocation2 + $0x90] sm:$0xff]
    %v83 = vld [vmem:[#allocation2 + $0x98] sm:$0xff]
    %v84 = vld [vmem:[#allocation2 + $0xa0] sm:$0xff]
    %v85 = vld [vmem:[#allocation2 + $0xa8] sm:$0xff]
    %v86 = vld [vmem:[#allocation2 + $0xb0] sm:$0xff]
    %v87 = vld [vmem:[#allocation2 + $0xb8] sm:$0xff]
    %v88 = vld [vmem:[#allocation2 + $0xc0] sm:$0xff]
    %v89 = vld [vmem:[#allocation2 + $0xc8] sm:$0xff]
    %v90 = vld [vmem:[#allocation2 + $0xd0] sm:$0xff]
    %v91 = vld [vmem:[#allocation2 + $0xd8] sm:$0xff]
    %v92 = vld [vmem:[#allocation2 + $0xe0] sm:$0xff]
    %v93 = vld [vmem:[#allocation2 + $0xe8] sm:$0xff]
    %v94 = vld [vmem:[#allocation2 + $0xf0] sm:$0xff]
    %v95 = vld [vmem:[#allocation2 + $0xf8] sm:$0xff]
    %v96 = vld [vmem:[#allocation2 + $0x100] sm:$0xff]
    %v97 = vld [vmem:[#allocation2 + $0x108] sm:$0xff]
    %v98 = vld [vmem:[#allocation2 + $0x110] sm:$0xff]
    %v99 = vld [vmem:[#allocation2 + $0x118] sm:$0xff]
    %v100 = vperm.slane %v99, 0
    %vm101 = vcmask 261120
    %v103 = vsel %vm101, %v66, 0
    %v106 = vsel %vm101, %v69, 0
    %108 = vmatpush.msra.mxu0 0.0
    %109 = vmatpush.msra.mxu0 0.0
    %110 = vmatpush.msra.mxu0 0.0
    %111 = vmatpush.msra.mxu0 0.0
    %112 = vmatpush.msra.mxu0 0.0
    %113 = vmatpush.msra.mxu0 0.0
    %114 = vmatpush.msra.mxu0 0.0
    %115 = vmatpush.msra.mxu0 0.0
    %116 = vmatpush.msra.mxu0 0.0
    %117 = vmatpush.msra.mxu0 0.0
    %118 = vmatpush.msra.mxu0 0.0
    %119 = vmatpush.msra.mxu0 0.0
    %120 = vmatpush.msra.mxu0 %v74
    %121 = vmatpush.msra.mxu0 %v73
    %122 = vmatpush.msra.mxu0 %v72
    %123 = vmatpush.msra.mxu0 %v71
    %124 = vmatmul.f32.gmra.mxu0 %v103
    %v125 = vpop.f32.mrf.mxu0
    %v126 = vadd.f32 %v100, %v125
    %127 = vmatmul.f32.gmra.mxu0 %v106
    %v128 = vpop.f32.mrf.mxu0
    %v129 = vadd.f32 %v100, %v128
    %130 = vdwg.mxu0
    %132 = vrot.lane.b32.xlu0 %v126, 96
    %v133 = vpop.permute.xlu0 %132
    %vm134 = vcmask 64512
    %v135 = vsel %vm134, %v126, 0
    %v137 = vsel %vm134, %v133, 0
    %139 = vmatpush.xpose.msra.mxu0 0.0
    %140 = vmatpush.xpose.msra.mxu0 0.0
    %141 = vmatpush.xpose.msra.mxu0 0.0
    %142 = vmatpush.xpose.msra.mxu0 0.0
    %143 = vmatpush.xpose.msra.mxu0 0.0
    %144 = vmatpush.xpose.msra.mxu0 0.0
    %145 = vmatpush.xpose.msra.mxu0 0.0
    %146 = vmatpush.xpose.msra.mxu0 0.0
    %147 = vmatpush.xpose.msra.mxu0 0.0
    %148 = vmatpush.xpose.msra.mxu0 0.0
    %149 = vmatpush.xpose.msra.mxu0 0.0
    %150 = vmatpush.xpose.msra.mxu0 0.0
    %151 = vmatpush.xpose.msra.mxu0 0.0
    %152 = vmatpush.xpose.msra.mxu0 0.0
    %153 = vmatpush.xpose.msra.mxu0 0.0
    %154 = vmatpush.xpose.msra.mxu0 %v137
    %155 = vmatmul.f32.gmra.mxu0 %v135
    %v156 = vpop.f32.mrf.mxu0
    %v157 = vadd.f32 0.0, %v156
    %158 = vdwg.mxu0
    %160 = vrot.lane.b32.xlu0 %v129, 96
    %v161 = vpop.permute.xlu0 %160
    %v162 = vsel %vm134, %v129, 0
    %v164 = vsel %vm134, %v161, 0
    %166 = vmatpush.xpose.msra.mxu0 0.0
    %167 = vmatpush.xpose.msra.mxu0 0.0
    %168 = vmatpush.xpose.msra.mxu0 0.0
    %169 = vmatpush.xpose.msra.mxu0 0.0
    %170 = vmatpush.xpose.msra.mxu0 0.0
    %171 = vmatpush.xpose.msra.mxu0 0.0
    %172 = vmatpush.xpose.msra.mxu0 0.0
    %173 = vmatpush.xpose.msra.mxu0 0.0
    %174 = vmatpush.xpose.msra.mxu0 0.0
    %175 = vmatpush.xpose.msra.mxu0 0.0
    %176 = vmatpush.xpose.msra.mxu0 0.0
    %177 = vmatpush.xpose.msra.mxu0 0.0
    %178 = vmatpush.xpose.msra.mxu0 0.0
    %179 = vmatpush.xpose.msra.mxu0 0.0
    %180 = vmatpush.xpose.msra.mxu0 0.0
    %181 = vmatpush.xpose.msra.mxu0 %v164
    %182 = vmatmul.f32.gmra.mxu0 %v162
    %v183 = vpop.f32.mrf.mxu0
    %v184 = vadd.f32 0.0, %v183
    %185 = vdwg.mxu0
    %v186 = vmul.f32 %v157, 0.35355338
    %v187 = vmul.f32 %v184, 0.35355338
    %v188 = vsel %vm134, %v186, -inf
    %189 = vmax.xlane.f32.xlu0 %v188
    %v190 = vpop.xlane.xlu0 %189
    %v191 = vsel %vm134, %v187, -inf
    %192 = vmax.xlane.f32.xlu0 %v191
    %v193 = vpop.xlane.xlu0 %192
    %v194 = vsub.f32 %v186, %v190
    %v195 = vsub.f32 %v187, %v193
    %v196 = vmul.f32 %v194, 1.442695
    %v197 = vpow.pop %v196
    %v198 = vmul.f32 %v195, 1.442695
    %v199 = vpow.pop %v198
    %v200 = vsel %vm134, %v197, 0.0
    %201 = vadd.xlane.f32.xlu0 %v200
    %v202 = vpop.xlane.xlu0 %201
    %v203 = vsel %vm134, %v199, 0.0
    %204 = vadd.xlane.f32.xlu0 %v203
    %v205 = vpop.xlane.xlu0 %204
    %v206 = vrcp.pop %v202
    %v207 = vmul.f32 %v202, %v206
    %v208 = vsub.f32 1.0, %v207
    %v209 = vmul.f32 %v206, %v208
    %v210 = vadd.f32 %v206, %v209
    %vm211 = vweird.f32 %v202
    %vm212 = vweird.f32 %v206
    %vm213 = vmor %vm211, %vm212
    %v214 = vsel %vm213, %v206, %v210
    %v215 = vand.u32 2147483647, %v202
    %vm216 = vcmp.eq.f32.partialorder %v215, 8.507059e+37
    %v217 = vand.u32 %v202, 2147483648
    %v218 = vor.u32 1.1754944e-38, %v217
    %v219 = vsel %vm216, %v218, %v214
    %v220 = vmul.f32 %v197, %v219
    %v221 = vrcp.pop %v205
    %v222 = vmul.f32 %v205, %v221
    %v223 = vsub.f32 1.0, %v222
    %v224 = vmul.f32 %v221, %v223
    %v225 = vadd.f32 %v221, %v224
    %vm226 = vweird.f32 %v205
    %vm227 = vweird.f32 %v221
    %vm228 = vmor %vm226, %vm227
    %v229 = vsel %vm228, %v221, %v225
    %v230 = vand.u32 2147483647, %v205
    %vm231 = vcmp.eq.f32.partialorder %v230, 8.507059e+37
    %v232 = vand.u32 %v205, 2147483648
    %v233 = vor.u32 1.1754944e-38, %v232
    %v234 = vsel %vm231, %v233, %v229
    %v235 = vmul.f32 %v199, %v234
    %236 = vrot.lane.b32.xlu0 %v126, 64
    %v237 = vpop.permute.xlu0 %236
    %v240 = vsel %vm134, %v220, 0
    %242 = vmatpush.msra.mxu0 0.0
    %243 = vmatpush.msra.mxu0 0.0
    %244 = vmatpush.msra.mxu0 0.0
    %245 = vmatpush.msra.mxu0 0.0
    %246 = vmatpush.msra.mxu0 0.0
    %247 = vmatpush.msra.mxu0 0.0
    %248 = vmatpush.msra.mxu0 0.0
    %249 = vmatpush.msra.mxu0 0.0
    %250 = vmatpush.msra.mxu0 0.0
    %251 = vmatpush.msra.mxu0 0.0
    %252 = vmatpush.msra.mxu0 0.0
    %253 = vmatpush.msra.mxu0 0.0
    %254 = vmatpush.msra.mxu0 0.0
    %255 = vmatpush.msra.mxu0 0.0
    %256 = vmatpush.msra.mxu0 0.0
    %257 = vmatpush.msra.mxu0 %v237
    %258 = vmatmul.f32.gmra.mxu0 %v240
    %v259 = vpop.f32.mrf.mxu0
    %v260 = vadd.f32 0.0, %v259
    %261 = vdwg.mxu0
    %262 = vrot.lane.b32.xlu0 %v129, 64
    %v263 = vpop.permute.xlu0 %262
    %v266 = vsel %vm134, %v235, 0
    %268 = vmatpush.msra.mxu0 0.0
    %269 = vmatpush.msra.mxu0 0.0
    %270 = vmatpush.msra.mxu0 0.0
    %271 = vmatpush.msra.mxu0 0.0
    %272 = vmatpush.msra.mxu0 0.0
    %273 = vmatpush.msra.mxu0 0.0
    %274 = vmatpush.msra.mxu0 0.0
    %275 = vmatpush.msra.mxu0 0.0
    %276 = vmatpush.msra.mxu0 0.0
    %277 = vmatpush.msra.mxu0 0.0
    %278 = vmatpush.msra.mxu0 0.0
    %279 = vmatpush.msra.mxu0 0.0
    %280 = vmatpush.msra.mxu0 0.0
    %281 = vmatpush.msra.mxu0 0.0
    %282 = vmatpush.msra.mxu0 0.0
    %283 = vmatpush.msra.mxu0 %v263
    %284 = vmatmul.f32.gmra.mxu0 %v266
    %v285 = vpop.f32.mrf.mxu0
    %v286 = vadd.f32 0.0, %v285
    %287 = vdwg.mxu0
    %288 = vrot.lane.b32.xlu0 %v126, 120
    %v289 = vpop.permute.xlu0 %288
    %290 = vrot.lane.b32.xlu0 %v126, 88
    %v291 = vpop.permute.xlu0 %290
    %v292 = vsel %vm134, %v289, 0
    %v294 = vsel %vm134, %v291, 0
    %296 = vmatpush.xpose.msra.mxu0 0.0
    %297 = vmatpush.xpose.msra.mxu0 0.0
    %298 = vmatpush.xpose.msra.mxu0 0.0
    %299 = vmatpush.xpose.msra.mxu0 0.0
    %300 = vmatpush.xpose.msra.mxu0 0.0
    %301 = vmatpush.xpose.msra.mxu0 0.0
    %302 = vmatpush.xpose.msra.mxu0 0.0
    %303 = vmatpush.xpose.msra.mxu0 0.0
    %304 = vmatpush.xpose.msra.mxu0 0.0
    %305 = vmatpush.xpose.msra.mxu0 0.0
    %306 = vmatpush.xpose.msra.mxu0 0.0
    %307 = vmatpush.xpose.msra.mxu0 0.0
    %308 = vmatpush.xpose.msra.mxu0 0.0
    %309 = vmatpush.xpose.msra.mxu0 0.0
    %310 = vmatpush.xpose.msra.mxu0 0.0
    %311 = vmatpush.xpose.msra.mxu0 %v294
    %312 = vmatmul.f32.gmra.mxu0 %v292
    %v313 = vpop.f32.mrf.mxu0
    %v314 = vadd.f32 0.0, %v313
    %315 = vdwg.mxu0
    %316 = vrot.lane.b32.xlu0 %v129, 120
    %v317 = vpop.permute.xlu0 %316
    %318 = vrot.lane.b32.xlu0 %v129, 88
    %v319 = vpop.permute.xlu0 %318
    %v320 = vsel %vm134, %v317, 0
    %v322 = vsel %vm134, %v319, 0
    %324 = vmatpush.xpose.msra.mxu0 0.0
    %325 = vmatpush.xpose.msra.mxu0 0.0
    %326 = vmatpush.xpose.msra.mxu0 0.0
    %327 = vmatpush.xpose.msra.mxu0 0.0
    %328 = vmatpush.xpose.msra.mxu0 0.0
    %329 = vmatpush.xpose.msra.mxu0 0.0
    %330 = vmatpush.xpose.msra.mxu0 0.0
    %331 = vmatpush.xpose.msra.mxu0 0.0
    %332 = vmatpush.xpose.msra.mxu0 0.0
    %333 = vmatpush.xpose.msra.mxu0 0.0
    %334 = vmatpush.xpose.msra.mxu0 0.0
    %335 = vmatpush.xpose.msra.mxu0 0.0
    %336 = vmatpush.xpose.msra.mxu0 0.0
    %337 = vmatpush.xpose.msra.mxu0 0.0
    %338 = vmatpush.xpose.msra.mxu0 0.0
    %339 = vmatpush.xpose.msra.mxu0 %v322
    %340 = vmatmul.f32.gmra.mxu0 %v320
    %v341 = vpop.f32.mrf.mxu0
    %v342 = vadd.f32 0.0, %v341
    %343 = vdwg.mxu0
    %v344 = vmul.f32 %v314, 0.35355338
    %v345 = vmul.f32 %v342, 0.35355338
    %v346 = vsel %vm134, %v344, -inf
    %347 = vmax.xlane.f32.xlu0 %v346
    %v348 = vpop.xlane.xlu0 %347
    %v349 = vsel %vm134, %v345, -inf
    %350 = vmax.xlane.f32.xlu0 %v349
    %v351 = vpop.xlane.xlu0 %350
    %v352 = vsub.f32 %v344, %v348
    %v353 = vsub.f32 %v345, %v351
    %v354 = vmul.f32 %v352, 1.442695
    %v355 = vpow.pop %v354
    %v356 = vmul.f32 %v353, 1.442695
    %v357 = vpow.pop %v356
    %v358 = vsel %vm134, %v355, 0.0
    %359 = vadd.xlane.f32.xlu0 %v358
    %v360 = vpop.xlane.xlu0 %359
    %v361 = vsel %vm134, %v357, 0.0
    %362 = vadd.xlane.f32.xlu0 %v361
    %v363 = vpop.xlane.xlu0 %362
    %v364 = vrcp.pop %v360
    %v365 = vmul.f32 %v360, %v364
    %v366 = vsub.f32 1.0, %v365
    %v367 = vmul.f32 %v364, %v366
    %v368 = vadd.f32 %v364, %v367
    %vm369 = vweird.f32 %v360
    %vm370 = vweird.f32 %v364
    %vm371 = vmor %vm369, %vm370
    %v372 = vsel %vm371, %v364, %v368
    %v373 = vand.u32 2147483647, %v360
    %vm374 = vcmp.eq.f32.partialorder %v373, 8.507059e+37
    %v375 = vand.u32 %v360, 2147483648
    %v376 = vor.u32 1.1754944e-38, %v375
    %v377 = vsel %vm374, %v376, %v372
    %v378 = vmul.f32 %v355, %v377
    %v379 = vrcp.pop %v363
    %v380 = vmul.f32 %v363, %v379
    %v381 = vsub.f32 1.0, %v380
    %v382 = vmul.f32 %v379, %v381
    %v383 = vadd.f32 %v379, %v382
    %vm384 = vweird.f32 %v363
    %vm385 = vweird.f32 %v379
    %vm386 = vmor %vm384, %vm385
    %v387 = vsel %vm386, %v379, %v383
    %v388 = vand.u32 2147483647, %v363
    %vm389 = vcmp.eq.f32.partialorder %v388, 8.507059e+37
    %v390 = vand.u32 %v363, 2147483648
    %v391 = vor.u32 1.1754944e-38, %v390
    %v392 = vsel %vm389, %v391, %v387
    %v393 = vmul.f32 %v357, %v392
    %394 = vrot.lane.b32.xlu0 %v126, 56
    %v395 = vpop.permute.xlu0 %394
    %v398 = vsel %vm134, %v378, 0
    %400 = vmatpush.msra.mxu0 0.0
    %401 = vmatpush.msra.mxu0 0.0
    %402 = vmatpush.msra.mxu0 0.0
    %403 = vmatpush.msra.mxu0 0.0
    %404 = vmatpush.msra.mxu0 0.0
    %405 = vmatpush.msra.mxu0 0.0
    %406 = vmatpush.msra.mxu0 0.0
    %407 = vmatpush.msra.mxu0 0.0
    %408 = vmatpush.msra.mxu0 0.0
    %409 = vmatpush.msra.mxu0 0.0
    %410 = vmatpush.msra.mxu0 0.0
    %411 = vmatpush.msra.mxu0 0.0
    %412 = vmatpush.msra.mxu0 0.0
    %413 = vmatpush.msra.mxu0 0.0
    %414 = vmatpush.msra.mxu0 0.0
    %415 = vmatpush.msra.mxu0 %v395
    %416 = vmatmul.f32.gmra.mxu0 %v398
    %v417 = vpop.f32.mrf.mxu0
    %v418 = vadd.f32 0.0, %v417
    %419 = vdwg.mxu0
    %420 = vrot.lane.b32.xlu0 %v129, 56
    %v421 = vpop.permute.xlu0 %420
    %v424 = vsel %vm134, %v393, 0
    %426 = vmatpush.msra.mxu0 0.0
    %427 = vmatpush.msra.mxu0 0.0
    %428 = vmatpush.msra.mxu0 0.0
    %429 = vmatpush.msra.mxu0 0.0
    %430 = vmatpush.msra.mxu0 0.0
    %431 = vmatpush.msra.mxu0 0.0
    %432 = vmatpush.msra.mxu0 0.0
    %433 = vmatpush.msra.mxu0 0.0
    %434 = vmatpush.msra.mxu0 0.0
    %435 = vmatpush.msra.mxu0 0.0
    %436 = vmatpush.msra.mxu0 0.0
    %437 = vmatpush.msra.mxu0 0.0
    %438 = vmatpush.msra.mxu0 0.0
    %439 = vmatpush.msra.mxu0 0.0
    %440 = vmatpush.msra.mxu0 0.0
    %441 = vmatpush.msra.mxu0 %v421
    %442 = vmatmul.f32.gmra.mxu0 %v424
    %v443 = vpop.f32.mrf.mxu0
    %v444 = vadd.f32 0.0, %v443
    %445 = vdwg.mxu0
    %446 = vrot.lane.b32.xlu0 %v126, 112
    %v447 = vpop.permute.xlu0 %446
    %448 = vrot.lane.b32.xlu0 %v126, 80
    %v449 = vpop.permute.xlu0 %448
    %v450 = vsel %vm134, %v447, 0
    %v452 = vsel %vm134, %v449, 0
    %454 = vmatpush.xpose.msra.mxu0 0.0
    %455 = vmatpush.xpose.msra.mxu0 0.0
    %456 = vmatpush.xpose.msra.mxu0 0.0
    %457 = vmatpush.xpose.msra.mxu0 0.0
    %458 = vmatpush.xpose.msra.mxu0 0.0
    %459 = vmatpush.xpose.msra.mxu0 0.0
    %460 = vmatpush.xpose.msra.mxu0 0.0
    %461 = vmatpush.xpose.msra.mxu0 0.0
    %462 = vmatpush.xpose.msra.mxu0 0.0
    %463 = vmatpush.xpose.msra.mxu0 0.0
    %464 = vmatpush.xpose.msra.mxu0 0.0
    %465 = vmatpush.xpose.msra.mxu0 0.0
    %466 = vmatpush.xpose.msra.mxu0 0.0
    %467 = vmatpush.xpose.msra.mxu0 0.0
    %468 = vmatpush.xpose.msra.mxu0 0.0
    %469 = vmatpush.xpose.msra.mxu0 %v452
    %470 = vmatmul.f32.gmra.mxu0 %v450
    %v471 = vpop.f32.mrf.mxu0
    %v472 = vadd.f32 0.0, %v471
    %473 = vdwg.mxu0
    %474 = vrot.lane.b32.xlu0 %v129, 112
    %v475 = vpop.permute.xlu0 %474
    %476 = vrot.lane.b32.xlu0 %v129, 80
    %v477 = vpop.permute.xlu0 %476
    %v478 = vsel %vm134, %v475, 0
    %v480 = vsel %vm134, %v477, 0
    %482 = vmatpush.xpose.msra.mxu0 0.0
    %483 = vmatpush.xpose.msra.mxu0 0.0
    %484 = vmatpush.xpose.msra.mxu0 0.0
    %485 = vmatpush.xpose.msra.mxu0 0.0
    %486 = vmatpush.xpose.msra.mxu0 0.0
    %487 = vmatpush.xpose.msra.mxu0 0.0
    %488 = vmatpush.xpose.msra.mxu0 0.0
    %489 = vmatpush.xpose.msra.mxu0 0.0
    %490 = vmatpush.xpose.msra.mxu0 0.0
    %491 = vmatpush.xpose.msra.mxu0 0.0
    %492 = vmatpush.xpose.msra.mxu0 0.0
    %493 = vmatpush.xpose.msra.mxu0 0.0
    %494 = vmatpush.xpose.msra.mxu0 0.0
    %495 = vmatpush.xpose.msra.mxu0 0.0
    %496 = vmatpush.xpose.msra.mxu0 0.0
    %497 = vmatpush.xpose.msra.mxu0 %v480
    %498 = vmatmul.f32.gmra.mxu0 %v478
    %v499 = vpop.f32.mrf.mxu0
    %v500 = vadd.f32 0.0, %v499
    %501 = vdwg.mxu0
    %v502 = vmul.f32 %v472, 0.35355338
    %v503 = vmul.f32 %v500, 0.35355338
    %v504 = vsel %vm134, %v502, -inf
    %505 = vmax.xlane.f32.xlu0 %v504
    %v506 = vpop.xlane.xlu0 %505
    %v507 = vsel %vm134, %v503, -inf
    %508 = vmax.xlane.f32.xlu0 %v507
    %v509 = vpop.xlane.xlu0 %508
    %v510 = vsub.f32 %v502, %v506
    %v511 = vsub.f32 %v503, %v509
    %v512 = vmul.f32 %v510, 1.442695
    %v513 = vpow.pop %v512
    %v514 = vmul.f32 %v511, 1.442695
    %v515 = vpow.pop %v514
    %v516 = vsel %vm134, %v513, 0.0
    %517 = vadd.xlane.f32.xlu0 %v516
    %v518 = vpop.xlane.xlu0 %517
    %v519 = vsel %vm134, %v515, 0.0
    %520 = vadd.xlane.f32.xlu0 %v519
    %v521 = vpop.xlane.xlu0 %520
    %v522 = vrcp.pop %v518
    %v523 = vmul.f32 %v518, %v522
    %v524 = vsub.f32 1.0, %v523
    %v525 = vmul.f32 %v522, %v524
    %v526 = vadd.f32 %v522, %v525
    %vm527 = vweird.f32 %v518
    %vm528 = vweird.f32 %v522
    %vm529 = vmor %vm527, %vm528
    %v530 = vsel %vm529, %v522, %v526
    %v531 = vand.u32 2147483647, %v518
    %vm532 = vcmp.eq.f32.partialorder %v531, 8.507059e+37
    %v533 = vand.u32 %v518, 2147483648
    %v534 = vor.u32 1.1754944e-38, %v533
    %v535 = vsel %vm532, %v534, %v530
    %v536 = vmul.f32 %v513, %v535
    %v537 = vrcp.pop %v521
    %v538 = vmul.f32 %v521, %v537
    %v539 = vsub.f32 1.0, %v538
    %v540 = vmul.f32 %v537, %v539
    %v541 = vadd.f32 %v537, %v540
    %vm542 = vweird.f32 %v521
    %vm543 = vweird.f32 %v537
    %vm544 = vmor %vm542, %vm543
    %v545 = vsel %vm544, %v537, %v541
    %v546 = vand.u32 2147483647, %v521
    %vm547 = vcmp.eq.f32.partialorder %v546, 8.507059e+37
    %v548 = vand.u32 %v521, 2147483648
    %v549 = vor.u32 1.1754944e-38, %v548
    %v550 = vsel %vm547, %v549, %v545
    %v551 = vmul.f32 %v515, %v550
    %552 = vrot.lane.b32.xlu0 %v126, 48
    %v553 = vpop.permute.xlu0 %552
    %v556 = vsel %vm134, %v536, 0
    %558 = vmatpush.msra.mxu0 0.0
    %559 = vmatpush.msra.mxu0 0.0
    %560 = vmatpush.msra.mxu0 0.0
    %561 = vmatpush.msra.mxu0 0.0
    %562 = vmatpush.msra.mxu0 0.0
    %563 = vmatpush.msra.mxu0 0.0
    %564 = vmatpush.msra.mxu0 0.0
    %565 = vmatpush.msra.mxu0 0.0
    %566 = vmatpush.msra.mxu0 0.0
    %567 = vmatpush.msra.mxu0 0.0
    %568 = vmatpush.msra.mxu0 0.0
    %569 = vmatpush.msra.mxu0 0.0
    %570 = vmatpush.msra.mxu0 0.0
    %571 = vmatpush.msra.mxu0 0.0
    %572 = vmatpush.msra.mxu0 0.0
    %573 = vmatpush.msra.mxu0 %v553
    %574 = vmatmul.f32.gmra.mxu0 %v556
    %v575 = vpop.f32.mrf.mxu0
    %v576 = vadd.f32 0.0, %v575
    %577 = vdwg.mxu0
    %578 = vrot.lane.b32.xlu0 %v129, 48
    %v579 = vpop.permute.xlu0 %578
    %v582 = vsel %vm134, %v551, 0
    %584 = vmatpush.msra.mxu0 0.0
    %585 = vmatpush.msra.mxu0 0.0
    %586 = vmatpush.msra.mxu0 0.0
    %587 = vmatpush.msra.mxu0 0.0
    %588 = vmatpush.msra.mxu0 0.0
    %589 = vmatpush.msra.mxu0 0.0
    %590 = vmatpush.msra.mxu0 0.0
    %591 = vmatpush.msra.mxu0 0.0
    %592 = vmatpush.msra.mxu0 0.0
    %593 = vmatpush.msra.mxu0 0.0
    %594 = vmatpush.msra.mxu0 0.0
    %595 = vmatpush.msra.mxu0 0.0
    %596 = vmatpush.msra.mxu0 0.0
    %597 = vmatpush.msra.mxu0 0.0
    %598 = vmatpush.msra.mxu0 0.0
    %599 = vmatpush.msra.mxu0 %v579
    %600 = vmatmul.f32.gmra.mxu0 %v582
    %v601 = vpop.f32.mrf.mxu0
    %v602 = vadd.f32 0.0, %v601
    %603 = vdwg.mxu0
    %604 = vrot.lane.b32.xlu0 %v126, 104
    %v605 = vpop.permute.xlu0 %604
    %606 = vrot.lane.b32.xlu0 %v126, 72
    %v607 = vpop.permute.xlu0 %606
    %v608 = vsel %vm134, %v605, 0
    %v610 = vsel %vm134, %v607, 0
    %612 = vmatpush.xpose.msra.mxu0 0.0
    %613 = vmatpush.xpose.msra.mxu0 0.0
    %614 = vmatpush.xpose.msra.mxu0 0.0
    %615 = vmatpush.xpose.msra.mxu0 0.0
    %616 = vmatpush.xpose.msra.mxu0 0.0
    %617 = vmatpush.xpose.msra.mxu0 0.0
    %618 = vmatpush.xpose.msra.mxu0 0.0
    %619 = vmatpush.xpose.msra.mxu0 0.0
    %620 = vmatpush.xpose.msra.mxu0 0.0
    %621 = vmatpush.xpose.msra.mxu0 0.0
    %622 = vmatpush.xpose.msra.mxu0 0.0
    %623 = vmatpush.xpose.msra.mxu0 0.0
    %624 = vmatpush.xpose.msra.mxu0 0.0
    %625 = vmatpush.xpose.msra.mxu0 0.0
    %626 = vmatpush.xpose.msra.mxu0 0.0
    %627 = vmatpush.xpose.msra.mxu0 %v610
    %628 = vmatmul.f32.gmra.mxu0 %v608
    %v629 = vpop.f32.mrf.mxu0
    %v630 = vadd.f32 0.0, %v629
    %631 = vdwg.mxu0
    %632 = vrot.lane.b32.xlu0 %v129, 104
    %v633 = vpop.permute.xlu0 %632
    %634 = vrot.lane.b32.xlu0 %v129, 72
    %v635 = vpop.permute.xlu0 %634
    %v636 = vsel %vm134, %v633, 0
    %v638 = vsel %vm134, %v635, 0
    %640 = vmatpush.xpose.msra.mxu0 0.0
    %641 = vmatpush.xpose.msra.mxu0 0.0
    %642 = vmatpush.xpose.msra.mxu0 0.0
    %643 = vmatpush.xpose.msra.mxu0 0.0
    %644 = vmatpush.xpose.msra.mxu0 0.0
    %645 = vmatpush.xpose.msra.mxu0 0.0
    %646 = vmatpush.xpose.msra.mxu0 0.0
    %647 = vmatpush.xpose.msra.mxu0 0.0
    %648 = vmatpush.xpose.msra.mxu0 0.0
    %649 = vmatpush.xpose.msra.mxu0 0.0
    %650 = vmatpush.xpose.msra.mxu0 0.0
    %651 = vmatpush.xpose.msra.mxu0 0.0
    %652 = vmatpush.xpose.msra.mxu0 0.0
    %653 = vmatpush.xpose.msra.mxu0 0.0
    %654 = vmatpush.xpose.msra.mxu0 0.0
    %655 = vmatpush.xpose.msra.mxu0 %v638
    %656 = vmatmul.f32.gmra.mxu0 %v636
    %v657 = vpop.f32.mrf.mxu0
    %v658 = vadd.f32 0.0, %v657
    %659 = vdwg.mxu0
    %v660 = vmul.f32 %v630, 0.35355338
    %v661 = vmul.f32 %v658, 0.35355338
    %v662 = vsel %vm134, %v660, -inf
    %663 = vmax.xlane.f32.xlu0 %v662
    %v664 = vpop.xlane.xlu0 %663
    %v665 = vsel %vm134, %v661, -inf
    %666 = vmax.xlane.f32.xlu0 %v665
    %v667 = vpop.xlane.xlu0 %666
    %v668 = vsub.f32 %v660, %v664
    %v669 = vsub.f32 %v661, %v667
    %v670 = vmul.f32 %v668, 1.442695
    %v671 = vpow.pop %v670
    %v672 = vmul.f32 %v669, 1.442695
    %v673 = vpow.pop %v672
    %v674 = vsel %vm134, %v671, 0.0
    %675 = vadd.xlane.f32.xlu0 %v674
    %v676 = vpop.xlane.xlu0 %675
    %v677 = vsel %vm134, %v673, 0.0
    %678 = vadd.xlane.f32.xlu0 %v677
    %v679 = vpop.xlane.xlu0 %678
    %v680 = vrcp.pop %v676
    %v681 = vmul.f32 %v676, %v680
    %v682 = vsub.f32 1.0, %v681
    %v683 = vmul.f32 %v680, %v682
    %v684 = vadd.f32 %v680, %v683
    %vm685 = vweird.f32 %v676
    %vm686 = vweird.f32 %v680
    %vm687 = vmor %vm685, %vm686
    %v688 = vsel %vm687, %v680, %v684
    %v689 = vand.u32 2147483647, %v676
    %vm690 = vcmp.eq.f32.partialorder %v689, 8.507059e+37
    %v691 = vand.u32 %v676, 2147483648
    %v692 = vor.u32 1.1754944e-38, %v691
    %v693 = vsel %vm690, %v692, %v688
    %v694 = vmul.f32 %v671, %v693
    %v695 = vrcp.pop %v679
    %v696 = vmul.f32 %v679, %v695
    %v697 = vsub.f32 1.0, %v696
    %v698 = vmul.f32 %v695, %v697
    %v699 = vadd.f32 %v695, %v698
    %vm700 = vweird.f32 %v679
    %vm701 = vweird.f32 %v695
    %vm702 = vmor %vm700, %vm701
    %v703 = vsel %vm702, %v695, %v699
    %v704 = vand.u32 2147483647, %v679
    %vm705 = vcmp.eq.f32.partialorder %v704, 8.507059e+37
    %v706 = vand.u32 %v679, 2147483648
    %v707 = vor.u32 1.1754944e-38, %v706
    %v708 = vsel %vm705, %v707, %v703
    %v709 = vmul.f32 %v673, %v708
    %710 = vrot.lane.b32.xlu0 %v126, 40
    %v711 = vpop.permute.xlu0 %710
    %v714 = vsel %vm134, %v694, 0
    %716 = vmatpush.msra.mxu0 0.0
    %717 = vmatpush.msra.mxu0 0.0
    %718 = vmatpush.msra.mxu0 0.0
    %719 = vmatpush.msra.mxu0 0.0
    %720 = vmatpush.msra.mxu0 0.0
    %721 = vmatpush.msra.mxu0 0.0
    %722 = vmatpush.msra.mxu0 0.0
    %723 = vmatpush.msra.mxu0 0.0
    %724 = vmatpush.msra.mxu0 0.0
    %725 = vmatpush.msra.mxu0 0.0
    %726 = vmatpush.msra.mxu0 0.0
    %727 = vmatpush.msra.mxu0 0.0
    %728 = vmatpush.msra.mxu0 0.0
    %729 = vmatpush.msra.mxu0 0.0
    %730 = vmatpush.msra.mxu0 0.0
    %731 = vmatpush.msra.mxu0 %v711
    %732 = vmatmul.f32.gmra.mxu0 %v714
    %v733 = vpop.f32.mrf.mxu0
    %v734 = vadd.f32 0.0, %v733
    %735 = vdwg.mxu0
    %736 = vrot.lane.b32.xlu0 %v129, 40
    %v737 = vpop.permute.xlu0 %736
    %v740 = vsel %vm134, %v709, 0
    %742 = vmatpush.msra.mxu0 0.0
    %743 = vmatpush.msra.mxu0 0.0
    %744 = vmatpush.msra.mxu0 0.0
    %745 = vmatpush.msra.mxu0 0.0
    %746 = vmatpush.msra.mxu0 0.0
    %747 = vmatpush.msra.mxu0 0.0
    %748 = vmatpush.msra.mxu0 0.0
    %749 = vmatpush.msra.mxu0 0.0
    %750 = vmatpush.msra.mxu0 0.0
    %751 = vmatpush.msra.mxu0 0.0
    %752 = vmatpush.msra.mxu0 0.0
    %753 = vmatpush.msra.mxu0 0.0
    %754 = vmatpush.msra.mxu0 0.0
    %755 = vmatpush.msra.mxu0 0.0
    %756 = vmatpush.msra.mxu0 0.0
    %757 = vmatpush.msra.mxu0 %v737
    %758 = vmatmul.f32.gmra.mxu0 %v740
    %v759 = vpop.f32.mrf.mxu0
    %v760 = vadd.f32 0.0, %v759
    %761 = vdwg.mxu0
    %764 = vrot.lane.b32.xlu0 %v418, 8
    %v765 = vpop.permute.xlu0 %764
    %766 = vrot.lane.b32.xlu0 %v444, 8
    %v767 = vpop.permute.xlu0 %766
    %772 = vrot.lane.b32.xlu0 %v576, 16
    %v773 = vpop.permute.xlu0 %772
    %774 = vrot.lane.b32.xlu0 %v602, 16
    %v775 = vpop.permute.xlu0 %774
    %780 = vrot.lane.b32.xlu0 %v734, 24
    %v781 = vpop.permute.xlu0 %780
    %782 = vrot.lane.b32.xlu0 %v760, 24
    %v783 = vpop.permute.xlu0 %782
    %v786 = vsel %vm134, %v260, %v765
    %v787 = vsel %vm134, %v286, %v767
    %vm788 = vcmask 130048
    %v789 = vsel %vm788, %v786, %v773
    %v790 = vsel %vm788, %v787, %v775
    %vm791 = vcmask 195584
    %v792 = vsel %vm791, %v789, %v781
    %v793 = vsel %vm791, %v790, %v783
    %v794 = vperm.slane %v99, 1
    %v796 = vsel %vm101, %v792, 0
    %v799 = vsel %vm101, %v793, 0
    %801 = vmatpush.msra.mxu0 0.0
    %802 = vmatpush.msra.mxu0 0.0
    %803 = vmatpush.msra.mxu0 0.0
    %804 = vmatpush.msra.mxu0 0.0
    %805 = vmatpush.msra.mxu0 0.0
    %806 = vmatpush.msra.mxu0 0.0
    %807 = vmatpush.msra.mxu0 0.0
    %808 = vmatpush.msra.mxu0 0.0
    %809 = vmatpush.msra.mxu0 0.0
    %810 = vmatpush.msra.mxu0 0.0
    %811 = vmatpush.msra.mxu0 0.0
    %812 = vmatpush.msra.mxu0 0.0
    %813 = vmatpush.msra.mxu0 %v78
    %814 = vmatpush.msra.mxu0 %v77
    %815 = vmatpush.msra.mxu0 %v76
    %816 = vmatpush.msra.mxu0 %v75
    %817 = vmatmul.f32.gmra.mxu0 %v796
    %v818 = vpop.f32.mrf.mxu0
    %v819 = vadd.f32 %v794, %v818
    %820 = vmatmul.f32.gmra.mxu0 %v799
    %v821 = vpop.f32.mrf.mxu0
    %v822 = vadd.f32 %v794, %v821
    %823 = vdwg.mxu0
    %v824 = vadd.f32 %v66, %v819
    %v825 = vadd.f32 %v69, %v822
    %v826 = vsel %vm101, %v824, 0.0
    %827 = vadd.xlane.f32.xlu0 %v826
    %v828 = vpop.xlane.xlu0 %827
    %v829 = vsel %vm101, %v825, 0.0
    %830 = vadd.xlane.f32.xlu0 %v829
    %v831 = vpop.xlane.xlu0 %830
    %v832 = vrcp.pop 32.0
    %v833 = vmul.f32 32.0, %v832
    %v834 = vsub.f32 1.0, %v833
    %v835 = vmul.f32 %v832, %v834
    %v836 = vadd.f32 %v832, %v835
    %vm837 = vweird.f32 %v832
    %v838 = vsel %vm837, %v832, %v836
    %v839 = vmul.f32 %v828, %v838
    %v840 = vmul.f32 %v831, %v838
    %v841 = vsub.f32 %v824, %v839
    %v842 = vsub.f32 %v825, %v840
    %v843 = vmul.f32 %v841, %v841
    %v844 = vmul.f32 %v842, %v842
    %v845 = vsel %vm101, %v843, 0.0
    %846 = vadd.xlane.f32.xlu0 %v845
    %v847 = vpop.xlane.xlu0 %846
    %v848 = vsel %vm101, %v844, 0.0
    %849 = vadd.xlane.f32.xlu0 %v848
    %v850 = vpop.xlane.xlu0 %849
    %v851 = vmul.f32 %v847, %v838
    %v852 = vmul.f32 %v850, %v838
    %v853 = vadd.f32 %v851, 1e-05
    %v854 = vadd.f32 %v852, 1e-05
    %v855 = vrsqrt.pop %v853
    %v856 = vmul.f32 %v855, %v853
    %v857 = vmul.f32 %v856, %v855
    %v858 = vmul.f32 0.5, %v857
    %v859 = vsub.f32 1.5, %v858
    %v860 = vmul.f32 %v855, %v859
    %vm861 = vweird.f32 %v853
    %vm862 = vweird.f32 %v855
    %vm863 = vmor %vm861, %vm862
    %v864 = vsel %vm863, %v855, %v860
    %v865 = vrsqrt.pop %v854
    %v866 = vmul.f32 %v865, %v854
    %v867 = vmul.f32 %v866, %v865
    %v868 = vmul.f32 0.5, %v867
    %v869 = vsub.f32 1.5, %v868
    %v870 = vmul.f32 %v865, %v869
    %vm871 = vweird.f32 %v854
    %vm872 = vweird.f32 %v865
    %vm873 = vmor %vm871, %vm872
    %v874 = vsel %vm873, %v865, %v870
    %v875 = vmul.f32 %v841, %v864
    %v876 = vmul.f32 %v842, %v874
    %v877 = vperm.slane %v99, 2
    %v878 = vmul.f32 %v875, %v877
    %v879 = vmul.f32 %v876, %v877
    %v880 = vperm.slane %v99, 3
    %v881 = vadd.f32 %v878, %v880
    %v882 = vadd.f32 %v879, %v880
    %v883 = vperm.slane %v99, 4
    %v885 = vsel %vm101, %v881, 0
    %v888 = vsel %vm101, %v882, 0
    %890 = vmatpush.msra.mxu0 0.0
    %891 = vmatpush.msra.mxu0 0.0
    %892 = vmatpush.msra.mxu0 0.0
    %893 = vmatpush.msra.mxu0 0.0
    %894 = vmatpush.msra.mxu0 0.0
    %895 = vmatpush.msra.mxu0 0.0
    %896 = vmatpush.msra.mxu0 0.0
    %897 = vmatpush.msra.mxu0 0.0
    %898 = vmatpush.msra.mxu0 0.0
    %899 = vmatpush.msra.mxu0 0.0
    %900 = vmatpush.msra.mxu0 0.0
    %901 = vmatpush.msra.mxu0 0.0
    %902 = vmatpush.msra.mxu0 %v82
    %903 = vmatpush.msra.mxu0 %v81
    %904 = vmatpush.msra.mxu0 %v80
    %905 = vmatpush.msra.mxu0 %v79
    %906 = vmatmul.f32.gmra.mxu0 %v885
    %v907 = vpop.f32.mrf.mxu0
    %v908 = vadd.f32 %v883, %v907
    %909 = vmatmul.f32.gmra.mxu0 %v888
    %v910 = vpop.f32.mrf.mxu0
    %v911 = vadd.f32 %v883, %v910
    %912 = vdwg.mxu0
    %v913 = vmax.f32 %v908, 0.0
    %v914 = vmax.f32 %v911, 0.0
    %v915 = vperm.slane %v99, 5
    %916 = vmatpush.msra.mxu0 %v98
    %917 = vmatpush.msra.mxu0 %v97
    %918 = vmatpush.msra.mxu0 %v96
    %919 = vmatpush.msra.mxu0 %v95
    %920 = vmatpush.msra.mxu0 %v94
    %921 = vmatpush.msra.mxu0 %v93
    %922 = vmatpush.msra.mxu0 %v92
    %923 = vmatpush.msra.mxu0 %v91
    %924 = vmatpush.msra.mxu0 %v90
    %925 = vmatpush.msra.mxu0 %v89
    %926 = vmatpush.msra.mxu0 %v88
    %927 = vmatpush.msra.mxu0 %v87
    %928 = vmatpush.msra.mxu0 %v86
    %929 = vmatpush.msra.mxu0 %v85
    %930 = vmatpush.msra.mxu0 %v84
    %931 = vmatpush.msra.mxu0 %v83
    %932 = vmatmul.f32.gmra.mxu0 %v913
    %v933 = vpop.f32.mrf.mxu0
    %v934 = vadd.f32 %v915, %v933
    %935 = vmatmul.f32.gmra.mxu0 %v914
    %v936 = vpop.f32.mrf.mxu0
    %v937 = vadd.f32 %v915, %v936
    %938 = vdwg.mxu0
    %v939 = vadd.f32 %v881, %v934
    %v940 = vadd.f32 %v882, %v937
    %v941 = vsel %vm101, %v939, 0.0
    %942 = vadd.xlane.f32.xlu0 %v941
    %v943 = vpop.xlane.xlu0 %942
    %v944 = vsel %vm101, %v940, 0.0
    %945 = vadd.xlane.f32.xlu0 %v944
    %v946 = vpop.xlane.xlu0 %945
    %v947 = vmul.f32 %v943, %v838
    %v948 = vmul.f32 %v946, %v838
    %v949 = vsub.f32 %v939, %v947
    %v950 = vsub.f32 %v940, %v948
    %v951 = vmul.f32 %v949, %v949
    %v952 = vmul.f32 %v950, %v950
    %v953 = vsel %vm101, %v951, 0.0
    %954 = vadd.xlane.f32.xlu0 %v953
    %v955 = vpop.xlane.xlu0 %954
    %v956 = vsel %vm101, %v952, 0.0
    %957 = vadd.xlane.f32.xlu0 %v956
    %v958 = vpop.xlane.xlu0 %957
    %v959 = vmul.f32 %v955, %v838
    %v960 = vmul.f32 %v958, %v838
    %v961 = vadd.f32 %v959, 1e-05
    %v962 = vadd.f32 %v960, 1e-05
    %v963 = vrsqrt.pop %v961
    %v964 = vmul.f32 %v963, %v961
    %v965 = vmul.f32 %v964, %v963
    %v966 = vmul.f32 0.5, %v965
    %v967 = vsub.f32 1.5, %v966
    %v968 = vmul.f32 %v963, %v967
    %vm969 = vweird.f32 %v961
    %vm970 = vweird.f32 %v963
    %vm971 = vmor %vm969, %vm970
    %v972 = vsel %vm971, %v963, %v968
    %v973 = vrsqrt.pop %v962
    %v974 = vmul.f32 %v973, %v962
    %v975 = vmul.f32 %v974, %v973
    %v976 = vmul.f32 0.5, %v975
    %v977 = vsub.f32 1.5, %v976
    %v978 = vmul.f32 %v973, %v977
    %vm979 = vweird.f32 %v962
    %vm980 = vweird.f32 %v973
    %vm981 = vmor %vm979, %vm980
    %v982 = vsel %vm981, %v973, %v978
    %v983 = vmul.f32 %v949, %v972
    %v984 = vmul.f32 %v950, %v982
    %v985 = vperm.slane %v99, 6
    %v986 = vmul.f32 %v983, %v985
    %v987 = vmul.f32 %v984, %v985
    %v988 = vperm.slane %v99, 7
    %v989 = vadd.f32 %v986, %v988
    %v990 = vadd.f32 %v987, %v988
    %v991 = vld [vmem:[#allocation2 + $0x120] sm:$0xff]
    %v992 = vld [vmem:[#allocation2 + $0x128] sm:$0xff]
    %v993 = vld [vmem:[#allocation2 + $0x130] sm:$0xff]
    %v994 = vld [vmem:[#allocation2 + $0x138] sm:$0xff]
    %v995 = vld [vmem:[#allocation2 + $0x140] sm:$0xff]
    %v996 = vld [vmem:[#allocation2 + $0x148] sm:$0xff]
    %v997 = vld [vmem:[#allocation2 + $0x150] sm:$0xff]
    %v998 = vld [vmem:[#allocation2 + $0x158] sm:$0xff]
    %v999 = vld [vmem:[#allocation2 + $0x160] sm:$0xff]
    %v1000 = vld [vmem:[#allocation2 + $0x168] sm:$0xff]
    %v1001 = vld [vmem:[#allocation2 + $0x170] sm:$0xff]
    %v1002 = vld [vmem:[#allocation2 + $0x178] sm:$0xff]
    %v1003 = vld [vmem:[#allocation2 + $0x180] sm:$0xff]
    %v1004 = vld [vmem:[#allocation2 + $0x188] sm:$0xff]
    %v1005 = vld [vmem:[#allocation2 + $0x190] sm:$0xff]
    %v1006 = vld [vmem:[#allocation2 + $0x198] sm:$0xff]
    %v1007 = vld [vmem:[#allocation2 + $0x1a0] sm:$0xff]
    %v1008 = vld [vmem:[#allocation2 + $0x1a8] sm:$0xff]
    %v1009 = vld [vmem:[#allocation2 + $0x1b0] sm:$0xff]
    %v1010 = vld [vmem:[#allocation2 + $0x1b8] sm:$0xff]
    %v1011 = vld [vmem:[#allocation2 + $0x1c0] sm:$0xff]
    %v1012 = vld [vmem:[#allocation2 + $0x1c8] sm:$0xff]
    %v1013 = vld [vmem:[#allocation2 + $0x1d0] sm:$0xff]
    %v1014 = vld [vmem:[#allocation2 + $0x1d8] sm:$0xff]
    %v1015 = vld [vmem:[#allocation2 + $0x1e0] sm:$0xff]
    %v1016 = vld [vmem:[#allocation2 + $0x1e8] sm:$0xff]
    %v1017 = vld [vmem:[#allocation2 + $0x1f0] sm:$0xff]
    %v1018 = vld [vmem:[#allocation2 + $0x1f8] sm:$0xff]
    %v1019 = vld [vmem:[#allocation2 + $0x200] sm:$0xff]
    %v1020 = vperm.slane %v1019, 0
    %v1022 = vsel %vm101, %v989, 0
    %v1025 = vsel %vm101, %v990, 0
    %1027 = vmatpush.msra.mxu0 0.0
    %1028 = vmatpush.msra.mxu0 0.0
    %1029 = vmatpush.msra.mxu0 0.0
    %1030 = vmatpush.msra.mxu0 0.0
    %1031 = vmatpush.msra.mxu0 0.0
    %1032 = vmatpush.msra.mxu0 0.0
    %1033 = vmatpush.msra.mxu0 0.0
    %1034 = vmatpush.msra.mxu0 0.0
    %1035 = vmatpush.msra.mxu0 0.0
    %1036 = vmatpush.msra.mxu0 0.0
    %1037 = vmatpush.msra.mxu0 0.0
    %1038 = vmatpush.msra.mxu0 0.0
    %1039 = vmatpush.msra.mxu0 %v994
    %1040 = vmatpush.msra.mxu0 %v993
    %1041 = vmatpush.msra.mxu0 %v992
    %1042 = vmatpush.msra.mxu0 %v991
    %1043 = vmatmul.f32.gmra.mxu0 %v1022
    %v1044 = vpop.f32.mrf.mxu0
    %v1045 = vadd.f32 %v1020, %v1044
    %1046 = vmatmul.f32.gmra.mxu0 %v1025
    %v1047 = vpop.f32.mrf.mxu0
    %v1048 = vadd.f32 %v1020, %v1047
    %1049 = vdwg.mxu0
    %1051 = vrot.lane.b32.xlu0 %v1045, 96
    %v1052 = vpop.permute.xlu0 %1051
    %v1053 = vsel %vm134, %v1045, 0
    %v1055 = vsel %vm134, %v1052, 0
    %1057 = vmatpush.xpose.msra.mxu0 0.0
    %1058 = vmatpush.xpose.msra.mxu0 0.0
    %1059 = vmatpush.xpose.msra.mxu0 0.0
    %1060 = vmatpush.xpose.msra.mxu0 0.0
    %1061 = vmatpush.xpose.msra.mxu0 0.0
    %1062 = vmatpush.xpose.msra.mxu0 0.0
    %1063 = vmatpush.xpose.msra.mxu0 0.0
    %1064 = vmatpush.xpose.msra.mxu0 0.0
    %1065 = vmatpush.xpose.msra.mxu0 0.0
    %1066 = vmatpush.xpose.msra.mxu0 0.0
    %1067 = vmatpush.xpose.msra.mxu0 0.0
    %1068 = vmatpush.xpose.msra.mxu0 0.0
    %1069 = vmatpush.xpose.msra.mxu0 0.0
    %1070 = vmatpush.xpose.msra.mxu0 0.0
    %1071 = vmatpush.xpose.msra.mxu0 0.0
    %1072 = vmatpush.xpose.msra.mxu0 %v1055
    %1073 = vmatmul.f32.gmra.mxu0 %v1053
    %v1074 = vpop.f32.mrf.mxu0
    %v1075 = vadd.f32 0.0, %v1074
    %1076 = vdwg.mxu0
    %1078 = vrot.lane.b32.xlu0 %v1048, 96
    %v1079 = vpop.permute.xlu0 %1078
    %v1080 = vsel %vm134, %v1048, 0
    %v1082 = vsel %vm134, %v1079, 0
    %1084 = vmatpush.xpose.msra.mxu0 0.0
    %1085 = vmatpush.xpose.msra.mxu0 0.0
    %1086 = vmatpush.xpose.msra.mxu0 0.0
    %1087 = vmatpush.xpose.msra.mxu0 0.0
    %1088 = vmatpush.xpose.msra.mxu0 0.0
    %1089 = vmatpush.xpose.msra.mxu0 0.0
    %1090 = vmatpush.xpose.msra.mxu0 0.0
    %1091 = vmatpush.xpose.msra.mxu0 0.0
    %1092 = vmatpush.xpose.msra.mxu0 0.0
    %1093 = vmatpush.xpose.msra.mxu0 0.0
    %1094 = vmatpush.xpose.msra.mxu0 0.0
    %1095 = vmatpush.xpose.msra.mxu0 0.0
    %1096 = vmatpush.xpose.msra.mxu0 0.0
    %1097 = vmatpush.xpose.msra.mxu0 0.0
    %1098 = vmatpush.xpose.msra.mxu0 0.0
    %1099 = vmatpush.xpose.msra.mxu0 %v1082
    %1100 = vmatmul.f32.gmra.mxu0 %v1080
    %v1101 = vpop.f32.mrf.mxu0
    %v1102 = vadd.f32 0.0, %v1101
    %1103 = vdwg.mxu0
    %v1104 = vmul.f32 %v1075, 0.35355338
    %v1105 = vmul.f32 %v1102, 0.35355338
    %v1106 = vsel %vm134, %v1104, -inf
    %1107 = vmax.xlane.f32.xlu0 %v1106
    %v1108 = vpop.xlane.xlu0 %1107
    %v1109 = vsel %vm134, %v1105, -inf
    %1110 = vmax.xlane.f32.xlu0 %v1109
    %v1111 = vpop.xlane.xlu0 %1110
    %v1112 = vsub.f32 %v1104, %v1108
    %v1113 = vsub.f32 %v1105, %v1111
    %v1114 = vmul.f32 %v1112, 1.442695
    %v1115 = vpow.pop %v1114
    %v1116 = vmul.f32 %v1113, 1.442695
    %v1117 = vpow.pop %v1116
    %v1118 = vsel %vm134, %v1115, 0.0
    %1119 = vadd.xlane.f32.xlu0 %v1118
    %v1120 = vpop.xlane.xlu0 %1119
    %v1121 = vsel %vm134, %v1117, 0.0
    %1122 = vadd.xlane.f32.xlu0 %v1121
    %v1123 = vpop.xlane.xlu0 %1122
    %v1124 = vrcp.pop %v1120
    %v1125 = vmul.f32 %v1120, %v1124
    %v1126 = vsub.f32 1.0, %v1125
    %v1127 = vmul.f32 %v1124, %v1126
    %v1128 = vadd.f32 %v1124, %v1127
    %vm1129 = vweird.f32 %v1120
    %vm1130 = vweird.f32 %v1124
    %vm1131 = vmor %vm1129, %vm1130
    %v1132 = vsel %vm1131, %v1124, %v1128
    %v1133 = vand.u32 2147483647, %v1120
    %vm1134 = vcmp.eq.f32.partialorder %v1133, 8.507059e+37
    %v1135 = vand.u32 %v1120, 2147483648
    %v1136 = vor.u32 1.1754944e-38, %v1135
    %v1137 = vsel %vm1134, %v1136, %v1132
    %v1138 = vmul.f32 %v1115, %v1137
    %v1139 = vrcp.pop %v1123
    %v1140 = vmul.f32 %v1123, %v1139
    %v1141 = vsub.f32 1.0, %v1140
    %v1142 = vmul.f32 %v1139, %v1141
    %v1143 = vadd.f32 %v1139, %v1142
    %vm1144 = vweird.f32 %v1123
    %vm1145 = vweird.f32 %v1139
    %vm1146 = vmor %vm1144, %vm1145
    %v1147 = vsel %vm1146, %v1139, %v1143
    %v1148 = vand.u32 2147483647, %v1123
    %vm1149 = vcmp.eq.f32.partialorder %v1148, 8.507059e+37
    %v1150 = vand.u32 %v1123, 2147483648
    %v1151 = vor.u32 1.1754944e-38, %v1150
    %v1152 = vsel %vm1149, %v1151, %v1147
    %v1153 = vmul.f32 %v1117, %v1152
    %1154 = vrot.lane.b32.xlu0 %v1045, 64
    %v1155 = vpop.permute.xlu0 %1154
    %v1158 = vsel %vm134, %v1138, 0
    %1160 = vmatpush.msra.mxu0 0.0
    %1161 = vmatpush.msra.mxu0 0.0
    %1162 = vmatpush.msra.mxu0 0.0
    %1163 = vmatpush.msra.mxu0 0.0
    %1164 = vmatpush.msra.mxu0 0.0
    %1165 = vmatpush.msra.mxu0 0.0
    %1166 = vmatpush.msra.mxu0 0.0
    %1167 = vmatpush.msra.mxu0 0.0
    %1168 = vmatpush.msra.mxu0 0.0
    %1169 = vmatpush.msra.mxu0 0.0
    %1170 = vmatpush.msra.mxu0 0.0
    %1171 = vmatpush.msra.mxu0 0.0
    %1172 = vmatpush.msra.mxu0 0.0
    %1173 = vmatpush.msra.mxu0 0.0
    %1174 = vmatpush.msra.mxu0 0.0
    %1175 = vmatpush.msra.mxu0 %v1155
    %1176 = vmatmul.f32.gmra.mxu0 %v1158
    %v1177 = vpop.f32.mrf.mxu0
    %v1178 = vadd.f32 0.0, %v1177
    %1179 = vdwg.mxu0
    %1180 = vrot.lane.b32.xlu0 %v1048, 64
    %v1181 = vpop.permute.xlu0 %1180
    %v1184 = vsel %vm134, %v1153, 0
    %1186 = vmatpush.msra.mxu0 0.0
    %1187 = vmatpush.msra.mxu0 0.0
    %1188 = vmatpush.msra.mxu0 0.0
    %1189 = vmatpush.msra.mxu0 0.0
    %1190 = vmatpush.msra.mxu0 0.0
    %1191 = vmatpush.msra.mxu0 0.0
    %1192 = vmatpush.msra.mxu0 0.0
    %1193 = vmatpush.msra.mxu0 0.0
    %1194 = vmatpush.msra.mxu0 0.0
    %1195 = vmatpush.msra.mxu0 0.0
    %1196 = vmatpush.msra.mxu0 0.0
    %1197 = vmatpush.msra.mxu0 0.0
    %1198 = vmatpush.msra.mxu0 0.0
    %1199 = vmatpush.msra.mxu0 0.0
    %1200 = vmatpush.msra.mxu0 0.0
    %1201 = vmatpush.msra.mxu0 %v1181
    %1202 = vmatmul.f32.gmra.mxu0 %v1184
    %v1203 = vpop.f32.mrf.mxu0
    %v1204 = vadd.f32 0.0, %v1203
    %1205 = vdwg.mxu0
    %1206 = vrot.lane.b32.xlu0 %v1045, 120
    %v1207 = vpop.permute.xlu0 %1206
    %1208 = vrot.lane.b32.xlu0 %v1045, 88
    %v1209 = vpop.permute.xlu0 %1208
    %v1210 = vsel %vm134, %v1207, 0
    %v1212 = vsel %vm134, %v1209, 0
    %1214 = vmatpush.xpose.msra.mxu0 0.0
    %1215 = vmatpush.xpose.msra.mxu0 0.0
    %1216 = vmatpush.xpose.msra.mxu0 0.0
    %1217 = vmatpush.xpose.msra.mxu0 0.0
    %1218 = vmatpush.xpose.msra.mxu0 0.0
    %1219 = vmatpush.xpose.msra.mxu0 0.0
    %1220 = vmatpush.xpose.msra.mxu0 0.0
    %1221 = vmatpush.xpose.msra.mxu0 0.0
    %1222 = vmatpush.xpose.msra.mxu0 0.0
    %1223 = vmatpush.xpose.msra.mxu0 0.0
    %1224 = vmatpush.xpose.msra.mxu0 0.0
    %1225 = vmatpush.xpose.msra.mxu0 0.0
    %1226 = vmatpush.xpose.msra.mxu0 0.0
    %1227 = vmatpush.xpose.msra.mxu0 0.0
    %1228 = vmatpush.xpose.msra.mxu0 0.0
    %1229 = vmatpush.xpose.msra.mxu0 %v1212
    %1230 = vmatmul.f32.gmra.mxu0 %v1210
    %v1231 = vpop.f32.mrf.mxu0
    %v1232 = vadd.f32 0.0, %v1231
    %1233 = vdwg.mxu0
    %1234 = vrot.lane.b32.xlu0 %v1048, 120
    %v1235 = vpop.permute.xlu0 %1234
    %1236 = vrot.lane.b32.xlu0 %v1048, 88
    %v1237 = vpop.permute.xlu0 %1236
    %v1238 = vsel %vm134, %v1235, 0
    %v1240 = vsel %vm134, %v1237, 0
    %1242 = vmatpush.xpose.msra.mxu0 0.0
    %1243 = vmatpush.xpose.msra.mxu0 0.0
    %1244 = vmatpush.xpose.msra.mxu0 0.0
    %1245 = vmatpush.xpose.msra.mxu0 0.0
    %1246 = vmatpush.xpose.msra.mxu0 0.0
    %1247 = vmatpush.xpose.msra.mxu0 0.0
    %1248 = vmatpush.xpose.msra.mxu0 0.0
    %1249 = vmatpush.xpose.msra.mxu0 0.0
    %1250 = vmatpush.xpose.msra.mxu0 0.0
    %1251 = vmatpush.xpose.msra.mxu0 0.0
    %1252 = vmatpush.xpose.msra.mxu0 0.0
    %1253 = vmatpush.xpose.msra.mxu0 0.0
    %1254 = vmatpush.xpose.msra.mxu0 0.0
    %1255 = vmatpush.xpose.msra.mxu0 0.0
    %1256 = vmatpush.xpose.msra.mxu0 0.0
    %1257 = vmatpush.xpose.msra.mxu0 %v1240
    %1258 = vmatmul.f32.gmra.mxu0 %v1238
    %v1259 = vpop.f32.mrf.mxu0
    %v1260 = vadd.f32 0.0, %v1259
    %1261 = vdwg.mxu0
    %v1262 = vmul.f32 %v1232, 0.35355338
    %v1263 = vmul.f32 %v1260, 0.35355338
    %v1264 = vsel %vm134, %v1262, -inf
    %1265 = vmax.xlane.f32.xlu0 %v1264
    %v1266 = vpop.xlane.xlu0 %1265
    %v1267 = vsel %vm134, %v1263, -inf
    %1268 = vmax.xlane.f32.xlu0 %v1267
    %v1269 = vpop.xlane.xlu0 %1268
    %v1270 = vsub.f32 %v1262, %v1266
    %v1271 = vsub.f32 %v1263, %v1269
    %v1272 = vmul.f32 %v1270, 1.442695
    %v1273 = vpow.pop %v1272
    %v1274 = vmul.f32 %v1271, 1.442695
    %v1275 = vpow.pop %v1274
    %v1276 = vsel %vm134, %v1273, 0.0
    %1277 = vadd.xlane.f32.xlu0 %v1276
    %v1278 = vpop.xlane.xlu0 %1277
    %v1279 = vsel %vm134, %v1275, 0.0
    %1280 = vadd.xlane.f32.xlu0 %v1279
    %v1281 = vpop.xlane.xlu0 %1280
    %v1282 = vrcp.pop %v1278
    %v1283 = vmul.f32 %v1278, %v1282
    %v1284 = vsub.f32 1.0, %v1283
    %v1285 = vmul.f32 %v1282, %v1284
    %v1286 = vadd.f32 %v1282, %v1285
    %vm1287 = vweird.f32 %v1278
    %vm1288 = vweird.f32 %v1282
    %vm1289 = vmor %vm1287, %vm1288
    %v1290 = vsel %vm1289, %v1282, %v1286
    %v1291 = vand.u32 2147483647, %v1278
    %vm1292 = vcmp.eq.f32.partialorder %v1291, 8.507059e+37
    %v1293 = vand.u32 %v1278, 2147483648
    %v1294 = vor.u32 1.1754944e-38, %v1293
    %v1295 = vsel %vm1292, %v1294, %v1290
    %v1296 = vmul.f32 %v1273, %v1295
    %v1297 = vrcp.pop %v1281
    %v1298 = vmul.f32 %v1281, %v1297
    %v1299 = vsub.f32 1.0, %v1298
    %v1300 = vmul.f32 %v1297, %v1299
    %v1301 = vadd.f32 %v1297, %v1300
    %vm1302 = vweird.f32 %v1281
    %vm1303 = vweird.f32 %v1297
    %vm1304 = vmor %vm1302, %vm1303
    %v1305 = vsel %vm1304, %v1297, %v1301
    %v1306 = vand.u32 2147483647, %v1281
    %vm1307 = vcmp.eq.f32.partialorder %v1306, 8.507059e+37
    %v1308 = vand.u32 %v1281, 2147483648
    %v1309 = vor.u32 1.1754944e-38, %v1308
    %v1310 = vsel %vm1307, %v1309, %v1305
    %v1311 = vmul.f32 %v1275, %v1310
    %1312 = vrot.lane.b32.xlu0 %v1045, 56
    %v1313 = vpop.permute.xlu0 %1312
    %v1316 = vsel %vm134, %v1296, 0
    %1318 = vmatpush.msra.mxu0 0.0
    %1319 = vmatpush.msra.mxu0 0.0
    %1320 = vmatpush.msra.mxu0 0.0
    %1321 = vmatpush.msra.mxu0 0.0
    %1322 = vmatpush.msra.mxu0 0.0
    %1323 = vmatpush.msra.mxu0 0.0
    %1324 = vmatpush.msra.mxu0 0.0
    %1325 = vmatpush.msra.mxu0 0.0
    %1326 = vmatpush.msra.mxu0 0.0
    %1327 = vmatpush.msra.mxu0 0.0
    %1328 = vmatpush.msra.mxu0 0.0
    %1329 = vmatpush.msra.mxu0 0.0
    %1330 = vmatpush.msra.mxu0 0.0
    %1331 = vmatpush.msra.mxu0 0.0
    %1332 = vmatpush.msra.mxu0 0.0
    %1333 = vmatpush.msra.mxu0 %v1313
    %1334 = vmatmul.f32.gmra.mxu0 %v1316
    %v1335 = vpop.f32.mrf.mxu0
    %v1336 = vadd.f32 0.0, %v1335
    %1337 = vdwg.mxu0
    %1338 = vrot.lane.b32.xlu0 %v1048, 56
    %v1339 = vpop.permute.xlu0 %1338
    %v1342 = vsel %vm134, %v1311, 0
    %1344 = vmatpush.msra.mxu0 0.0
    %1345 = vmatpush.msra.mxu0 0.0
    %1346 = vmatpush.msra.mxu0 0.0
    %1347 = vmatpush.msra.mxu0 0.0
    %1348 = vmatpush.msra.mxu0 0.0
    %1349 = vmatpush.msra.mxu0 0.0
    %1350 = vmatpush.msra.mxu0 0.0
    %1351 = vmatpush.msra.mxu0 0.0
    %1352 = vmatpush.msra.mxu0 0.0
    %1353 = vmatpush.msra.mxu0 0.0
    %1354 = vmatpush.msra.mxu0 0.0
    %1355 = vmatpush.msra.mxu0 0.0
    %1356 = vmatpush.msra.mxu0 0.0
    %1357 = vmatpush.msra.mxu0 0.0
    %1358 = vmatpush.msra.mxu0 0.0
    %1359 = vmatpush.msra.mxu0 %v1339
    %1360 = vmatmul.f32.gmra.mxu0 %v1342
    %v1361 = vpop.f32.mrf.mxu0
    %v1362 = vadd.f32 0.0, %v1361
    %1363 = vdwg.mxu0
    %1364 = vrot.lane.b32.xlu0 %v1045, 112
    %v1365 = vpop.permute.xlu0 %1364
    %1366 = vrot.lane.b32.xlu0 %v1045, 80
    %v1367 = vpop.permute.xlu0 %1366
    %v1368 = vsel %vm134, %v1365, 0
    %v1370 = vsel %vm134, %v1367, 0
    %1372 = vmatpush.xpose.msra.mxu0 0.0
    %1373 = vmatpush.xpose.msra.mxu0 0.0
    %1374 = vmatpush.xpose.msra.mxu0 0.0
    %1375 = vmatpush.xpose.msra.mxu0 0.0
    %1376 = vmatpush.xpose.msra.mxu0 0.0
    %1377 = vmatpush.xpose.msra.mxu0 0.0
    %1378 = vmatpush.xpose.msra.mxu0 0.0
    %1379 = vmatpush.xpose.msra.mxu0 0.0
    %1380 = vmatpush.xpose.msra.mxu0 0.0
    %1381 = vmatpush.xpose.msra.mxu0 0.0
    %1382 = vmatpush.xpose.msra.mxu0 0.0
    %1383 = vmatpush.xpose.msra.mxu0 0.0
    %1384 = vmatpush.xpose.msra.mxu0 0.0
    %1385 = vmatpush.xpose.msra.mxu0 0.0
    %1386 = vmatpush.xpose.msra.mxu0 0.0
    %1387 = vmatpush.xpose.msra.mxu0 %v1370
    %1388 = vmatmul.f32.gmra.mxu0 %v1368
    %v1389 = vpop.f32.mrf.mxu0
    %v1390 = vadd.f32 0.0, %v1389
    %1391 = vdwg.mxu0
    %1392 = vrot.lane.b32.xlu0 %v1048, 112
    %v1393 = vpop.permute.xlu0 %1392
    %1394 = vrot.lane.b32.xlu0 %v1048, 80
    %v1395 = vpop.permute.xlu0 %1394
    %v1396 = vsel %vm134, %v1393, 0
    %v1398 = vsel %vm134, %v1395, 0
    %1400 = vmatpush.xpose.msra.mxu0 0.0
    %1401 = vmatpush.xpose.msra.mxu0 0.0
    %1402 = vmatpush.xpose.msra.mxu0 0.0
    %1403 = vmatpush.xpose.msra.mxu0 0.0
    %1404 = vmatpush.xpose.msra.mxu0 0.0
    %1405 = vmatpush.xpose.msra.mxu0 0.0
    %1406 = vmatpush.xpose.msra.mxu0 0.0
    %1407 = vmatpush.xpose.msra.mxu0 0.0
    %1408 = vmatpush.xpose.msra.mxu0 0.0
    %1409 = vmatpush.xpose.msra.mxu0 0.0
    %1410 = vmatpush.xpose.msra.mxu0 0.0
    %1411 = vmatpush.xpose.msra.mxu0 0.0
    %1412 = vmatpush.xpose.msra.mxu0 0.0
    %1413 = vmatpush.xpose.msra.mxu0 0.0
    %1414 = vmatpush.xpose.msra.mxu0 0.0
    %1415 = vmatpush.xpose.msra.mxu0 %v1398
    %1416 = vmatmul.f32.gmra.mxu0 %v1396
    %v1417 = vpop.f32.mrf.mxu0
    %v1418 = vadd.f32 0.0, %v1417
    %1419 = vdwg.mxu0
    %v1420 = vmul.f32 %v1390, 0.35355338
    %v1421 = vmul.f32 %v1418, 0.35355338
    %v1422 = vsel %vm134, %v1420, -inf
    %1423 = vmax.xlane.f32.xlu0 %v1422
    %v1424 = vpop.xlane.xlu0 %1423
    %v1425 = vsel %vm134, %v1421, -inf
    %1426 = vmax.xlane.f32.xlu0 %v1425
    %v1427 = vpop.xlane.xlu0 %1426
    %v1428 = vsub.f32 %v1420, %v1424
    %v1429 = vsub.f32 %v1421, %v1427
    %v1430 = vmul.f32 %v1428, 1.442695
    %v1431 = vpow.pop %v1430
    %v1432 = vmul.f32 %v1429, 1.442695
    %v1433 = vpow.pop %v1432
    %v1434 = vsel %vm134, %v1431, 0.0
    %1435 = vadd.xlane.f32.xlu0 %v1434
    %v1436 = vpop.xlane.xlu0 %1435
    %v1437 = vsel %vm134, %v1433, 0.0
    %1438 = vadd.xlane.f32.xlu0 %v1437
    %v1439 = vpop.xlane.xlu0 %1438
    %v1440 = vrcp.pop %v1436
    %v1441 = vmul.f32 %v1436, %v1440
    %v1442 = vsub.f32 1.0, %v1441
    %v1443 = vmul.f32 %v1440, %v1442
    %v1444 = vadd.f32 %v1440, %v1443
    %vm1445 = vweird.f32 %v1436
    %vm1446 = vweird.f32 %v1440
    %vm1447 = vmor %vm1445, %vm1446
    %v1448 = vsel %vm1447, %v1440, %v1444
    %v1449 = vand.u32 2147483647, %v1436
    %vm1450 = vcmp.eq.f32.partialorder %v1449, 8.507059e+37
    %v1451 = vand.u32 %v1436, 2147483648
    %v1452 = vor.u32 1.1754944e-38, %v1451
    %v1453 = vsel %vm1450, %v1452, %v1448
    %v1454 = vmul.f32 %v1431, %v1453
    %v1455 = vrcp.pop %v1439
    %v1456 = vmul.f32 %v1439, %v1455
    %v1457 = vsub.f32 1.0, %v1456
    %v1458 = vmul.f32 %v1455, %v1457
    %v1459 = vadd.f32 %v1455, %v1458
    %vm1460 = vweird.f32 %v1439
    %vm1461 = vweird.f32 %v1455
    %vm1462 = vmor %vm1460, %vm1461
    %v1463 = vsel %vm1462, %v1455, %v1459
    %v1464 = vand.u32 2147483647, %v1439
    %vm1465 = vcmp.eq.f32.partialorder %v1464, 8.507059e+37
    %v1466 = vand.u32 %v1439, 2147483648
    %v1467 = vor.u32 1.1754944e-38, %v1466
    %v1468 = vsel %vm1465, %v1467, %v1463
    %v1469 = vmul.f32 %v1433, %v1468
    %1470 = vrot.lane.b32.xlu0 %v1045, 48
    %v1471 = vpop.permute.xlu0 %1470
    %v1474 = vsel %vm134, %v1454, 0
    %1476 = vmatpush.msra.mxu0 0.0
    %1477 = vmatpush.msra.mxu0 0.0
    %1478 = vmatpush.msra.mxu0 0.0
    %1479 = vmatpush.msra.mxu0 0.0
    %1480 = vmatpush.msra.mxu0 0.0
    %1481 = vmatpush.msra.mxu0 0.0
    %1482 = vmatpush.msra.mxu0 0.0
    %1483 = vmatpush.msra.mxu0 0.0
    %1484 = vmatpush.msra.mxu0 0.0
    %1485 = vmatpush.msra.mxu0 0.0
    %1486 = vmatpush.msra.mxu0 0.0
    %1487 = vmatpush.msra.mxu0 0.0
    %1488 = vmatpush.msra.mxu0 0.0
    %1489 = vmatpush.msra.mxu0 0.0
    %1490 = vmatpush.msra.mxu0 0.0
    %1491 = vmatpush.msra.mxu0 %v1471
    %1492 = vmatmul.f32.gmra.mxu0 %v1474
    %v1493 = vpop.f32.mrf.mxu0
    %v1494 = vadd.f32 0.0, %v1493
    %1495 = vdwg.mxu0
    %1496 = vrot.lane.b32.xlu0 %v1048, 48
    %v1497 = vpop.permute.xlu0 %1496
    %v1500 = vsel %vm134, %v1469, 0
    %1502 = vmatpush.msra.mxu0 0.0
    %1503 = vmatpush.msra.mxu0 0.0
    %1504 = vmatpush.msra.mxu0 0.0
    %1505 = vmatpush.msra.mxu0 0.0
    %1506 = vmatpush.msra.mxu0 0.0
    %1507 = vmatpush.msra.mxu0 0.0
    %1508 = vmatpush.msra.mxu0 0.0
    %1509 = vmatpush.msra.mxu0 0.0
    %1510 = vmatpush.msra.mxu0 0.0
    %1511 = vmatpush.msra.mxu0 0.0
    %1512 = vmatpush.msra.mxu0 0.0
    %1513 = vmatpush.msra.mxu0 0.0
    %1514 = vmatpush.msra.mxu0 0.0
    %1515 = vmatpush.msra.mxu0 0.0
    %1516 = vmatpush.msra.mxu0 0.0
    %1517 = vmatpush.msra.mxu0 %v1497
    %1518 = vmatmul.f32.gmra.mxu0 %v1500
    %v1519 = vpop.f32.mrf.mxu0
    %v1520 = vadd.f32 0.0, %v1519
    %1521 = vdwg.mxu0
    %1522 = vrot.lane.b32.xlu0 %v1045, 104
    %v1523 = vpop.permute.xlu0 %1522
    %1524 = vrot.lane.b32.xlu0 %v1045, 72
    %v1525 = vpop.permute.xlu0 %1524
    %v1526 = vsel %vm134, %v1523, 0
    %v1528 = vsel %vm134, %v1525, 0
    %1530 = vmatpush.xpose.msra.mxu0 0.0
    %1531 = vmatpush.xpose.msra.mxu0 0.0
    %1532 = vmatpush.xpose.msra.mxu0 0.0
    %1533 = vmatpush.xpose.msra.mxu0 0.0
    %1534 = vmatpush.xpose.msra.mxu0 0.0
    %1535 = vmatpush.xpose.msra.mxu0 0.0
    %1536 = vmatpush.xpose.msra.mxu0 0.0
    %1537 = vmatpush.xpose.msra.mxu0 0.0
    %1538 = vmatpush.xpose.msra.mxu0 0.0
    %1539 = vmatpush.xpose.msra.mxu0 0.0
    %1540 = vmatpush.xpose.msra.mxu0 0.0
    %1541 = vmatpush.xpose.msra.mxu0 0.0
    %1542 = vmatpush.xpose.msra.mxu0 0.0
    %1543 = vmatpush.xpose.msra.mxu0 0.0
    %1544 = vmatpush.xpose.msra.mxu0 0.0
    %1545 = vmatpush.xpose.msra.mxu0 %v1528
    %1546 = vmatmul.f32.gmra.mxu0 %v1526
    %v1547 = vpop.f32.mrf.mxu0
    %v1548 = vadd.f32 0.0, %v1547
    %1549 = vdwg.mxu0
    %1550 = vrot.lane.b32.xlu0 %v1048, 104
    %v1551 = vpop.permute.xlu0 %1550
    %1552 = vrot.lane.b32.xlu0 %v1048, 72
    %v1553 = vpop.permute.xlu0 %1552
    %v1554 = vsel %vm134, %v1551, 0
    %v1556 = vsel %vm134, %v1553, 0
    %1558 = vmatpush.xpose.msra.mxu0 0.0
    %1559 = vmatpush.xpose.msra.mxu0 0.0
    %1560 = vmatpush.xpose.msra.mxu0 0.0
    %1561 = vmatpush.xpose.msra.mxu0 0.0
    %1562 = vmatpush.xpose.msra.mxu0 0.0
    %1563 = vmatpush.xpose.msra.mxu0 0.0
    %1564 = vmatpush.xpose.msra.mxu0 0.0
    %1565 = vmatpush.xpose.msra.mxu0 0.0
    %1566 = vmatpush.xpose.msra.mxu0 0.0
    %1567 = vmatpush.xpose.msra.mxu0 0.0
    %1568 = vmatpush.xpose.msra.mxu0 0.0
    %1569 = vmatpush.xpose.msra.mxu0 0.0
    %1570 = vmatpush.xpose.msra.mxu0 0.0
    %1571 = vmatpush.xpose.msra.mxu0 0.0
    %1572 = vmatpush.xpose.msra.mxu0 0.0
    %1573 = vmatpush.xpose.msra.mxu0 %v1556
    %1574 = vmatmul.f32.gmra.mxu0 %v1554
    %v1575 = vpop.f32.mrf.mxu0
    %v1576 = vadd.f32 0.0, %v1575
    %1577 = vdwg.mxu0
    %v1578 = vmul.f32 %v1548, 0.35355338
    %v1579 = vmul.f32 %v1576, 0.35355338
    %v1580 = vsel %vm134, %v1578, -inf
    %1581 = vmax.xlane.f32.xlu0 %v1580
    %v1582 = vpop.xlane.xlu0 %1581
    %v1583 = vsel %vm134, %v1579, -inf
    %1584 = vmax.xlane.f32.xlu0 %v1583
    %v1585 = vpop.xlane.xlu0 %1584
    %v1586 = vsub.f32 %v1578, %v1582
    %v1587 = vsub.f32 %v1579, %v1585
    %v1588 = vmul.f32 %v1586, 1.442695
    %v1589 = vpow.pop %v1588
    %v1590 = vmul.f32 %v1587, 1.442695
    %v1591 = vpow.pop %v1590
    %v1592 = vsel %vm134, %v1589, 0.0
    %1593 = vadd.xlane.f32.xlu0 %v1592
    %v1594 = vpop.xlane.xlu0 %1593
    %v1595 = vsel %vm134, %v1591, 0.0
    %1596 = vadd.xlane.f32.xlu0 %v1595
    %v1597 = vpop.xlane.xlu0 %1596
    %v1598 = vrcp.pop %v1594
    %v1599 = vmul.f32 %v1594, %v1598
    %v1600 = vsub.f32 1.0, %v1599
    %v1601 = vmul.f32 %v1598, %v1600
    %v1602 = vadd.f32 %v1598, %v1601
    %vm1603 = vweird.f32 %v1594
    %vm1604 = vweird.f32 %v1598
    %vm1605 = vmor %vm1603, %vm1604
    %v1606 = vsel %vm1605, %v1598, %v1602
    %v1607 = vand.u32 2147483647, %v1594
    %vm1608 = vcmp.eq.f32.partialorder %v1607, 8.507059e+37
    %v1609 = vand.u32 %v1594, 2147483648
    %v1610 = vor.u32 1.1754944e-38, %v1609
    %v1611 = vsel %vm1608, %v1610, %v1606
    %v1612 = vmul.f32 %v1589, %v1611
    %v1613 = vrcp.pop %v1597
    %v1614 = vmul.f32 %v1597, %v1613
    %v1615 = vsub.f32 1.0, %v1614
    %v1616 = vmul.f32 %v1613, %v1615
    %v1617 = vadd.f32 %v1613, %v1616
    %vm1618 = vweird.f32 %v1597
    %vm1619 = vweird.f32 %v1613
    %vm1620 = vmor %vm1618, %vm1619
    %v1621 = vsel %vm1620, %v1613, %v1617
    %v1622 = vand.u32 2147483647, %v1597
    %vm1623 = vcmp.eq.f32.partialorder %v1622, 8.507059e+37
    %v1624 = vand.u32 %v1597, 2147483648
    %v1625 = vor.u32 1.1754944e-38, %v1624
    %v1626 = vsel %vm1623, %v1625, %v1621
    %v1627 = vmul.f32 %v1591, %v1626
    %1628 = vrot.lane.b32.xlu0 %v1045, 40
    %v1629 = vpop.permute.xlu0 %1628
    %v1632 = vsel %vm134, %v1612, 0
    %1634 = vmatpush.msra.mxu0 0.0
    %1635 = vmatpush.msra.mxu0 0.0
    %1636 = vmatpush.msra.mxu0 0.0
    %1637 = vmatpush.msra.mxu0 0.0
    %1638 = vmatpush.msra.mxu0 0.0
    %1639 = vmatpush.msra.mxu0 0.0
    %1640 = vmatpush.msra.mxu0 0.0
    %1641 = vmatpush.msra.mxu0 0.0
    %1642 = vmatpush.msra.mxu0 0.0
    %1643 = vmatpush.msra.mxu0 0.0
    %1644 = vmatpush.msra.mxu0 0.0
    %1645 = vmatpush.msra.mxu0 0.0
    %1646 = vmatpush.msra.mxu0 0.0
    %1647 = vmatpush.msra.mxu0 0.0
    %1648 = vmatpush.msra.mxu0 0.0
    %1649 = vmatpush.msra.mxu0 %v1629
    %1650 = vmatmul.f32.gmra.mxu0 %v1632
    %v1651 = vpop.f32.mrf.mxu0
    %v1652 = vadd.f32 0.0, %v1651
    %1653 = vdwg.mxu0
    %1654 = vrot.lane.b32.xlu0 %v1048, 40
    %v1655 = vpop.permute.xlu0 %1654
    %v1658 = vsel %vm134, %v1627, 0
    %1660 = vmatpush.msra.mxu0 0.0
    %1661 = vmatpush.msra.mxu0 0.0
    %1662 = vmatpush.msra.mxu0 0.0
    %1663 = vmatpush.msra.mxu0 0.0
    %1664 = vmatpush.msra.mxu0 0.0
    %1665 = vmatpush.msra.mxu0 0.0
    %1666 = vmatpush.msra.mxu0 0.0
    %1667 = vmatpush.msra.mxu0 0.0
    %1668 = vmatpush.msra.mxu0 0.0
    %1669 = vmatpush.msra.mxu0 0.0
    %1670 = vmatpush.msra.mxu0 0.0
    %1671 = vmatpush.msra.mxu0 0.0
    %1672 = vmatpush.msra.mxu0 0.0
    %1673 = vmatpush.msra.mxu0 0.0
    %1674 = vmatpush.msra.mxu0 0.0
    %1675 = vmatpush.msra.mxu0 %v1655
    %1676 = vmatmul.f32.gmra.mxu0 %v1658
    %v1677 = vpop.f32.mrf.mxu0
    %v1678 = vadd.f32 0.0, %v1677
    %1679 = vdwg.mxu0
    %1682 = vrot.lane.b32.xlu0 %v1336, 8
    %v1683 = vpop.permute.xlu0 %1682
    %1684 = vrot.lane.b32.xlu0 %v1362, 8
    %v1685 = vpop.permute.xlu0 %1684
    %1690 = vrot.lane.b32.xlu0 %v1494, 16
    %v1691 = vpop.permute.xlu0 %1690
    %1692 = vrot.lane.b32.xlu0 %v1520, 16
    %v1693 = vpop.permute.xlu0 %1692
    %1698 = vrot.lane.b32.xlu0 %v1652, 24
    %v1699 = vpop.permute.xlu0 %1698
    %1700 = vrot.lane.b32.xlu0 %v1678, 24
    %v1701 = vpop.permute.xlu0 %1700
    %v1704 = vsel %vm134, %v1178, %v1683
    %v1705 = vsel %vm134, %v1204, %v1685
    %v1706 = vsel %vm788, %v1704, %v1691
    %v1707 = vsel %vm788, %v1705, %v1693
    %v1708 = vsel %vm791, %v1706, %v1699
    %v1709 = vsel %vm791, %v1707, %v1701
    %v1710 = vperm.slane %v1019, 1
    %v1712 = vsel %vm101, %v1708, 0
    %v1715 = vsel %vm101, %v1709, 0
    %1717 = vmatpush.msra.mxu0 0.0
    %1718 = vmatpush.msra.mxu0 0.0
    %1719 = vmatpush.msra.mxu0 0.0
    %1720 = vmatpush.msra.mxu0 0.0
    %1721 = vmatpush.msra.mxu0 0.0
    %1722 = vmatpush.msra.mxu0 0.0
    %1723 = vmatpush.msra.mxu0 0.0
    %1724 = vmatpush.msra.mxu0 0.0
    %1725 = vmatpush.msra.mxu0 0.0
    %1726 = vmatpush.msra.mxu0 0.0
    %1727 = vmatpush.msra.mxu0 0.0
    %1728 = vmatpush.msra.mxu0 0.0
    %1729 = vmatpush.msra.mxu0 %v998
    %1730 = vmatpush.msra.mxu0 %v997
    %1731 = vmatpush.msra.mxu0 %v996
    %1732 = vmatpush.msra.mxu0 %v995
    %1733 = vmatmul.f32.gmra.mxu0 %v1712
    %v1734 = vpop.f32.mrf.mxu0
    %v1735 = vadd.f32 %v1710, %v1734
    %1736 = vmatmul.f32.gmra.mxu0 %v1715
    %v1737 = vpop.f32.mrf.mxu0
    %v1738 = vadd.f32 %v1710, %v1737
    %1739 = vdwg.mxu0
    %v1740 = vadd.f32 %v989, %v1735
    %v1741 = vadd.f32 %v990, %v1738
    %v1742 = vsel %vm101, %v1740, 0.0
    %1743 = vadd.xlane.f32.xlu0 %v1742
    %v1744 = vpop.xlane.xlu0 %1743
    %v1745 = vsel %vm101, %v1741, 0.0
    %1746 = vadd.xlane.f32.xlu0 %v1745
    %v1747 = vpop.xlane.xlu0 %1746
    %v1748 = vmul.f32 %v1744, %v838
    %v1749 = vmul.f32 %v1747, %v838
    %v1750 = vsub.f32 %v1740, %v1748
    %v1751 = vsub.f32 %v1741, %v1749
    %v1752 = vmul.f32 %v1750, %v1750
    %v1753 = vmul.f32 %v1751, %v1751
    %v1754 = vsel %vm101, %v1752, 0.0
    %1755 = vadd.xlane.f32.xlu0 %v1754
    %v1756 = vpop.xlane.xlu0 %1755
    %v1757 = vsel %vm101, %v1753, 0.0
    %1758 = vadd.xlane.f32.xlu0 %v1757
    %v1759 = vpop.xlane.xlu0 %1758
    %v1760 = vmul.f32 %v1756, %v838
    %v1761 = vmul.f32 %v1759, %v838
    %v1762 = vadd.f32 %v1760, 1e-05
    %v1763 = vadd.f32 %v1761, 1e-05
    %v1764 = vrsqrt.pop %v1762
    %v1765 = vmul.f32 %v1764, %v1762
    %v1766 = vmul.f32 %v1765, %v1764
    %v1767 = vmul.f32 0.5, %v1766
    %v1768 = vsub.f32 1.5, %v1767
    %v1769 = vmul.f32 %v1764, %v1768
    %vm1770 = vweird.f32 %v1762
    %vm1771 = vweird.f32 %v1764
    %vm1772 = vmor %vm1770, %vm1771
    %v1773 = vsel %vm1772, %v1764, %v1769
    %v1774 = vrsqrt.pop %v1763
    %v1775 = vmul.f32 %v1774, %v1763
    %v1776 = vmul.f32 %v1775, %v1774
    %v1777 = vmul.f32 0.5, %v1776
    %v1778 = vsub.f32 1.5, %v1777
    %v1779 = vmul.f32 %v1774, %v1778
    %vm1780 = vweird.f32 %v1763
    %vm1781 = vweird.f32 %v1774
    %vm1782 = vmor %vm1780, %vm1781
    %v1783 = vsel %vm1782, %v1774, %v1779
    %v1784 = vmul.f32 %v1750, %v1773
    %v1785 = vmul.f32 %v1751, %v1783
    %v1786 = vperm.slane %v1019, 2
    %v1787 = vmul.f32 %v1784, %v1786
    %v1788 = vmul.f32 %v1785, %v1786
    %v1789 = vperm.slane %v1019, 3
    %v1790 = vadd.f32 %v1787, %v1789
    %v1791 = vadd.f32 %v1788, %v1789
    %v1792 = vperm.slane %v1019, 4
    %v1794 = vsel %vm101, %v1790, 0
    %v1797 = vsel %vm101, %v1791, 0
    %1799 = vmatpush.msra.mxu0 0.0
    %1800 = vmatpush.msra.mxu0 0.0
    %1801 = vmatpush.msra.mxu0 0.0
    %1802 = vmatpush.msra.mxu0 0.0
    %1803 = vmatpush.msra.mxu0 0.0
    %1804 = vmatpush.msra.mxu0 0.0
    %1805 = vmatpush.msra.mxu0 0.0
    %1806 = vmatpush.msra.mxu0 0.0
    %1807 = vmatpush.msra.mxu0 0.0
    %1808 = vmatpush.msra.mxu0 0.0
    %1809 = vmatpush.msra.mxu0 0.0
    %1810 = vmatpush.msra.mxu0 0.0
    %1811 = vmatpush.msra.mxu0 %v1002
    %1812 = vmatpush.msra.mxu0 %v1001
    %1813 = vmatpush.msra.mxu0 %v1000
    %1814 = vmatpush.msra.mxu0 %v999
    %1815 = vmatmul.f32.gmra.mxu0 %v1794
    %v1816 = vpop.f32.mrf.mxu0
    %v1817 = vadd.f32 %v1792, %v1816
    %1818 = vmatmul.f32.gmra.mxu0 %v1797
    %v1819 = vpop.f32.mrf.mxu0
    %v1820 = vadd.f32 %v1792, %v1819
    %1821 = vdwg.mxu0
    %v1822 = vmax.f32 %v1817, 0.0
    %v1823 = vmax.f32 %v1820, 0.0
    %v1824 = vperm.slane %v1019, 5
    %1825 = vmatpush.msra.mxu0 %v1018
    %1826 = vmatpush.msra.mxu0 %v1017
    %1827 = vmatpush.msra.mxu0 %v1016
    %1828 = vmatpush.msra.mxu0 %v1015
    %1829 = vmatpush.msra.mxu0 %v1014
    %1830 = vmatpush.msra.mxu0 %v1013
    %1831 = vmatpush.msra.mxu0 %v1012
    %1832 = vmatpush.msra.mxu0 %v1011
    %1833 = vmatpush.msra.mxu0 %v1010
    %1834 = vmatpush.msra.mxu0 %v1009
    %1835 = vmatpush.msra.mxu0 %v1008
    %1836 = vmatpush.msra.mxu0 %v1007
    %1837 = vmatpush.msra.mxu0 %v1006
    %1838 = vmatpush.msra.mxu0 %v1005
    %1839 = vmatpush.msra.mxu0 %v1004
    %1840 = vmatpush.msra.mxu0 %v1003
    %1841 = vmatmul.f32.gmra.mxu0 %v1822
    %v1842 = vpop.f32.mrf.mxu0
    %v1843 = vadd.f32 %v1824, %v1842
    %1844 = vmatmul.f32.gmra.mxu0 %v1823
    %v1845 = vpop.f32.mrf.mxu0
    %v1846 = vadd.f32 %v1824, %v1845
    %1847 = vdwg.mxu0
    %v1848 = vadd.f32 %v1790, %v1843
    %v1849 = vadd.f32 %v1791, %v1846
    %v1850 = vsel %vm101, %v1848, 0.0
    %1851 = vadd.xlane.f32.xlu0 %v1850
    %v1852 = vpop.xlane.xlu0 %1851
    %v1853 = vsel %vm101, %v1849, 0.0
    %1854 = vadd.xlane.f32.xlu0 %v1853
    %v1855 = vpop.xlane.xlu0 %1854
    %v1856 = vmul.f32 %v1852, %v838
    %v1857 = vmul.f32 %v1855, %v838
    %v1858 = vsub.f32 %v1848, %v1856
    %v1859 = vsub.f32 %v1849, %v1857
    %v1860 = vmul.f32 %v1858, %v1858
    %v1861 = vmul.f32 %v1859, %v1859
    %v1862 = vsel %vm101, %v1860, 0.0
    %1863 = vadd.xlane.f32.xlu0 %v1862
    %v1864 = vpop.xlane.xlu0 %1863
    %v1865 = vsel %vm101, %v1861, 0.0
    %1866 = vadd.xlane.f32.xlu0 %v1865
    %v1867 = vpop.xlane.xlu0 %1866
    %v1868 = vmul.f32 %v1864, %v838
    %v1869 = vmul.f32 %v1867, %v838
    %v1870 = vadd.f32 %v1868, 1e-05
    %v1871 = vadd.f32 %v1869, 1e-05
    %v1872 = vrsqrt.pop %v1870
    %v1873 = vmul.f32 %v1872, %v1870
    %v1874 = vmul.f32 %v1873, %v1872
    %v1875 = vmul.f32 0.5, %v1874
    %v1876 = vsub.f32 1.5, %v1875
    %v1877 = vmul.f32 %v1872, %v1876
    %vm1878 = vweird.f32 %v1870
    %vm1879 = vweird.f32 %v1872
    %vm1880 = vmor %vm1878, %vm1879
    %v1881 = vsel %vm1880, %v1872, %v1877
    %v1882 = vrsqrt.pop %v1871
    %v1883 = vmul.f32 %v1882, %v1871
    %v1884 = vmul.f32 %v1883, %v1882
    %v1885 = vmul.f32 0.5, %v1884
    %v1886 = vsub.f32 1.5, %v1885
    %v1887 = vmul.f32 %v1882, %v1886
    %vm1888 = vweird.f32 %v1871
    %vm1889 = vweird.f32 %v1882
    %vm1890 = vmor %vm1888, %vm1889
    %v1891 = vsel %vm1890, %v1882, %v1887
    %v1892 = vmul.f32 %v1858, %v1881
    %v1893 = vmul.f32 %v1859, %v1891
    %v1894 = vperm.slane %v1019, 6
    %v1895 = vmul.f32 %v1892, %v1894
    %v1896 = vmul.f32 %v1893, %v1894
    %v1897 = vperm.slane %v1019, 7
    %v1898 = vadd.f32 %v1895, %v1897
    %v1899 = vadd.f32 %v1896, %v1897
    %v1900 = vrot.slane %v28, 5
    %v1901 = vsel %vm788, %v1900, 0
    %1903 = vmatpush.msra.mxu0 0.0
    %1904 = vmatpush.msra.mxu0 0.0
    %1905 = vmatpush.msra.mxu0 0.0
    %1906 = vmatpush.msra.mxu0 0.0
    %1907 = vmatpush.msra.mxu0 0.0
    %1908 = vmatpush.msra.mxu0 0.0
    %1909 = vmatpush.msra.mxu0 0.0
    %1910 = vmatpush.msra.mxu0 0.0
    %1911 = vmatpush.msra.mxu0 0.0
    %1912 = vmatpush.msra.mxu0 0.0
    %1913 = vmatpush.msra.mxu0 0.0
    %1914 = vmatpush.msra.mxu0 0.0
    %1915 = vmatpush.msra.mxu0 0.0
    %1916 = vmatpush.msra.mxu0 0.0
    %1917 = vmatpush.msra.mxu0 %v1899
    %1918 = vmatpush.msra.mxu0 %v1898
    %1919 = vmatmul.f32.gmra.mxu0 %v1901
    %v1920 = vpop.f32.mrf.mxu0
    %v1921 = vadd.f32 0.0, %v1920
    %1922 = vdwg.mxu0
    %v1923 = vperm.slane %v28, 4
    %v1925 = vsel %vm101, %v1921, 0
    %1927 = vmatpush.msra.mxu0 0.0
    %1928 = vmatpush.msra.mxu0 0.0
    %1929 = vmatpush.msra.mxu0 0.0
    %1930 = vmatpush.msra.mxu0 0.0
    %1931 = vmatpush.msra.mxu0 0.0
    %1932 = vmatpush.msra.mxu0 0.0
    %1933 = vmatpush.msra.mxu0 0.0
    %1934 = vmatpush.msra.mxu0 0.0
    %1935 = vmatpush.msra.mxu0 0.0
    %1936 = vmatpush.msra.mxu0 0.0
    %1937 = vmatpush.msra.mxu0 0.0
    %1938 = vmatpush.msra.mxu0 0.0
    %1939 = vmatpush.msra.mxu0 %v32
    %1940 = vmatpush.msra.mxu0 %v31
    %1941 = vmatpush.msra.mxu0 %v30
    %1942 = vmatpush.msra.mxu0 %v29
    %1943 = vmatmul.f32.gmra.mxu0 %v1925
    %v1944 = vpop.f32.mrf.mxu0
    %v1945 = vadd.f32 %v1923, %v1944
    %1946 = vdwg.mxu0
    %vm1947 = vcmask 25600
    %1948 = vst.msk [vmem:[#allocation5] sm:$0x3] %vm1947, %v1945
    // Predicated region
    $region14: #{_lambda_.1} parent=1 // pred_check
      _
    $region15: #{_lambda_.1} parent=1 // pred_check_branch
      %1950 = sbr.rel (0) target = $region17
    $region16: #{_lambda_.1} parent=1 // pred_region
      %1952 = vsyncadd [#allocation4], 0
      %s1954 = sshll.u32 [#allocation5], 4
      %s1955 = int_to_ptr.vmem [resolvable:$true] %s1954
      %s1956 = sshll.u32 %s2, 4
      %s1957 = int_to_ptr.hbm [resolvable:$true] %s1956
      %1959 = dma.vmem_to_hbm [thread:$0]  %s1955, 32, %s1957, [#allocation4]
    $region17: #{_lambda_.1} parent=1 // pred_fallthru
      _
    // Predicated region
    $region18: #{_lambda_.1} parent=1 // pred_check
      _
    $region19: #{_lambda_.1} parent=1 // pred_check_branch
      %1961 = sbr.rel (0) target = $region21
    $region20: #{_lambda_.1} parent=1 // pred_region
      %1963 = dma.done [#allocation4], 32
    $region21: #{_lambda_.1} parent=1 // pred_fallthru
      _
    %1964 = vsyncpa [#allocation3], 1
    %1965 = vsyncpa [#allocation4], 1

</llo_original>
